<compile_context>
chip_gen: v7x
topology: tpu7x:2x2x1
jax: 0.10.0
libtpu: 0.0.40
codegen_flags: <defaults>
</compile_context>

<pallas_src>
import math
import functools

import jax
import jax.numpy as jnp
from jax.experimental import pallas as pl
from jax.experimental.pallas import tpu as pltpu


# ------------------------- configuration -----------------------------------
CONFIG = dict(
    hidden_size=32,
    num_attention_heads=4,
    intermediate_size=64,
    num_hidden_layers=2,
    qkv_bias=True,
    attention_probs_dropout_prob=0.0,   # dropout is identity at inference
    hidden_dropout_prob=0.0,
    use_faster_attention=True,
)
LN_EPS = 1e-5  # PyTorch nn.LayerNorm default


# ------------------------- kernel helpers -----------------------------------
def _layernorm(v, gamma, beta):
    mu = jnp.mean(v, axis=-1, keepdims=True)
    var = jnp.mean((v - mu) ** 2, axis=-1, keepdims=True)
    return (v - mu) * jax.lax.rsqrt(var + LN_EPS) * gamma + beta


def _new_gelu(x):
    c = math.sqrt(2.0 / math.pi)
    return 0.5 * x * (1.0 + jnp.tanh(c * (x + 0.044715 * (x * x * x))))


# ------------------------- fused encoder kernel -----------------------------
def encoder_kernel(x_ref,
                   ln1g_ref, ln1b_ref,
                   wqkv_ref, bqkv_ref,
                   wo_ref, bo_ref,
                   ln2g_ref, ln2b_ref,
                   w1_ref, b1_ref,
                   w2_ref, b2_ref,
                   o_ref,
                   *, seq, hidden, num_heads, approx_softmax):
    f32 = jnp.float32
    bf16 = jnp.bfloat16
    dh = hidden // num_heads
    rows = o_ref.shape[0]           # batch_tile * seq
    bt = rows // seq
    layer = pl.program_id(1)        # grid = (batch_tiles, layers)

    # The resident output block IS the f32 activation carry across layers.
    @pl.when(layer == 0)
    def _():
        o_ref[...] = x_ref[...].astype(f32)

    x2d = o_ref[...]                                     # (rows, H), f32

    # ---- per-layer params: weights stay bf16 (native MXU operands) ---------
    g1, be1 = ln1g_ref[0], ln1b_ref[0]                   # (1, H) f32
    g2, be2 = ln2g_ref[0], ln2b_ref[0]
    wqkv, bqkv = wqkv_ref[0], bqkv_ref[0]                # (H,3H) bf16 / (1,3H) f32
    wo, bo = wo_ref[0], bo_ref[0]
    w1, b1 = w1_ref[0], b1_ref[0]
    w2, b2 = w2_ref[0], b2_ref[0]

    def mm(a, w, b):
        # bf16 x bf16 MXU matmul with f32 accumulation; bias add in f32.
        return jnp.dot(a.astype(bf16), w, preferred_element_type=f32) + b

    # ---- LayerNorm 1 + merged QKV projection (one bf16 MXU matmul) ---------
    h = _layernorm(x2d, g1, be1)
    qkv = mm(h, wqkv, bqkv)                              # (rows, 3H) f32
    # (Q columns of wqkv / bqkv already carry the 1/sqrt(dh) scale.)

    # ---- attention: ALL heads in one batched einsum -------------------------
    # Pack heads into the einsum batch dim (head-major, then batch tile) using
    # only reshape / lane-slice / concat patterns; two large batched einsums
    # replace the per-head K=dh matmul loop.
    # TODO(synk): at real ViT sizes use pltpu.einshape for this repack.
    def split_heads(t2d):
        t = t2d.reshape(bt, seq, hidden)                 # (bt, S, H)
        parts = [t[:, :, hd * dh:(hd + 1) * dh] for hd in range(num_heads)]
        return jnp.concatenate(parts, axis=0).astype(bf16)  # (nh*bt, S, dh)

    q = split_heads(qkv[:, 0 * hidden:1 * hidden])
    k = split_heads(qkv[:, 1 * hidden:2 * hidden])
    v = split_heads(qkv[:, 2 * hidden:3 * hidden])

    s = jnp.einsum('bqd,bkd->bqk', q, k,
                   preferred_element_type=f32)           # (nh*bt, S, S) f32
    s = s - jnp.max(s, axis=-1, keepdims=True)
    p = jnp.exp(s)
    denom = jnp.sum(p, axis=-1, keepdims=True)
    if approx_softmax:
        p = p * pl.reciprocal(denom, approx=True)        # EUP slot
    else:
        p = p / denom
    ctx = jnp.einsum('bqk,bkd->bqd', p.astype(bf16), v,
                     preferred_element_type=f32)         # (nh*bt, S, dh) f32

    ctx = jnp.concatenate(
        [ctx[hd * bt:(hd + 1) * bt] for hd in range(num_heads)], axis=-1)
    ctx = ctx.reshape(rows, hidden)                      # (rows, H) f32

    # ---- attention output projection + residual (f32) -----------------------
    x1 = x2d + mm(ctx, wo, bo)

    # ---- LayerNorm 2 + MLP (new-GELU) + residual (f32) ----------------------
    h2 = _layernorm(x1, g2, be2)
    m = mm(h2, w1, b1)
    m = _new_gelu(m)
    out = x1 + mm(m, w2, b2)

    # Carry to the next layer; HBM writeback happens once per batch tile
    # (output block index is constant along the layer axis).
    o_ref[...] = out

    # TODO(synk): dropout layers are identity (inference mode); no stochastic path.


# ------------------------- wrapper ------------------------------------------
def encoder_forward(x, layer_params, *, num_heads, batch_tile=None,
                    approx_softmax=True):
    """x: (B, S, H) float32. layer_params: list (length L) of per-layer dicts."""
    B, S, H = x.shape
    assert x.dtype == jnp.float32, "residual stream / layer carry is kept in f32"
    L = len(layer_params)
    I = layer_params[0]["w1"].shape[-1]
    dh = H // num_heads

    if batch_tile is None:
        batch_tile = 1 if B > 1 else B   # >= 2 tiles keeps both v7x cores busy
    assert B % batch_tile == 0
    row_tile = batch_tile * S
    assert row_tile % 8 == 0, "rows per batch tile must be a multiple of 8 sublanes"
    n_batch_tiles = B // batch_tile
    BS = B * S

    # Stack per-layer params along a leading L axis.  Weight matrices stream in
    # bf16 (native MXU operand dtype, half the HBM/VMEM traffic); biases and LN
    # params stay f32.  The 1/sqrt(dh) attention scale is folded into the Q
    # columns of wqkv / bqkv here (saves a VPU multiply over scores per layer).
    scale = 1.0 / math.sqrt(dh)

    def stack(name, dtype=jnp.float32, scale_q=False):
        arr = jnp.stack([p[name] for p in layer_params])
        if scale_q:
            arr = arr.at[..., :H].multiply(scale)
        return arr.astype(dtype)

    ln1_g, ln1_b = stack("ln1_g"), stack("ln1_b")            # (L, 1, H)
    wqkv = stack("wqkv", jnp.bfloat16, scale_q=True)         # (L, H, 3H)
    bqkv = stack("bqkv", scale_q=True)                       # (L, 1, 3H)
    wo, bo = stack("wo", jnp.bfloat16), stack("bo")
    ln2_g, ln2_b = stack("ln2_g"), stack("ln2_b")
    w1, b1 = stack("w1", jnp.bfloat16), stack("b1")
    w2, b2 = stack("w2", jnp.bfloat16), stack("b2")

    x2d = x.reshape(BS, H)

    kern = functools.partial(encoder_kernel, seq=S, hidden=H,
                             num_heads=num_heads, approx_softmax=approx_softmax)

    # activation blocks: one batch tile, resident across the layer axis
    act_spec = pl.BlockSpec((row_tile, H), lambda b, l: (b, 0))

    # one layer's worth of a stacked parameter per grid step
    def per_layer(shape):
        nd = len(shape)
        return pl.BlockSpec((1,) + shape, lambda b, l, nd=nd: (l,) + (0,) * nd)

    in_specs = [
        act_spec,                                        # x (B*S, H)
        per_layer((1, H)), per_layer((1, H)),            # ln1 gamma/beta
        per_layer((H, 3 * H)), per_layer((1, 3 * H)),    # qkv W, b (bf16 / f32)
        per_layer((H, H)), per_layer((1, H)),            # out proj W, b
        per_layer((1, H)), per_layer((1, H)),            # ln2 gamma/beta
        per_layer((H, I)), per_layer((1, I)),            # mlp dense1 W, b
        per_layer((I, H)), per_layer((1, H)),            # mlp dense2 W, b
    ]

    # Explicit VMEM budget: double-buffered bf16 layer weights + f32 biases
    # + activation/output tiles, with headroom; capped below v7x's 64 MiB.
    w_bytes = 2 * (H * 3 * H + H * H + 2 * H * I)            # bf16 weights / layer
    b_bytes = 4 * (3 * H + H + I + H + 4 * H)                # f32 biases+LN / layer
    act_bytes = row_tile * H * 4
    vmem_limit = int(min(48 * 1024 * 1024,
                         max(32 * 1024 * 1024,
                             4 * (w_bytes + b_bytes) + 8 * act_bytes + (4 << 20))))

    out2d = pl.pallas_call(
        kern,
        out_shape=jax.ShapeDtypeStruct((BS, H), x.dtype),
        grid=(n_batch_tiles, L),
        in_specs=in_specs,
        out_specs=act_spec,                              # output == layer carry
        compiler_params=pltpu.CompilerParams(
            dimension_semantics=("parallel", "arbitrary"),
            vmem_limit_bytes=vmem_limit),
    )(x2d, ln1_g, ln1_b, wqkv, bqkv, wo, bo, ln2_g, ln2_b, w1, b1, w2, b2)

    return out2d.reshape(B, S, H)


# ------------------------- deterministic param init -------------------------
def init_block_params(key, hidden_size, intermediate_size):
    H, I = hidden_size, intermediate_size
    ks = jax.random.split(key, 8)
    s = 0.02

    def w(k, shape):
        # bf16-representable values stored as f32 (so bf16 streaming is exact;
        # note: a real checkpoint loaded this way would be quantized to bf16).
        return (s * jax.random.normal(k, shape, jnp.float32)
                ).astype(jnp.bfloat16).astype(jnp.float32)

    return dict(
        ln1_g=jnp.ones((1, H), jnp.float32),
        ln1_b=jnp.zeros((1, H), jnp.float32),
        wqkv=w(ks[0], (H, 3 * H)),
        bqkv=s * jax.random.normal(ks[1], (1, 3 * H), jnp.float32),
        wo=w(ks[2], (H, H)),
        bo=s * jax.random.normal(ks[3], (1, H), jnp.float32),
        ln2_g=jnp.ones((1, H), jnp.float32),
        ln2_b=jnp.zeros((1, H), jnp.float32),
        w1=w(ks[4], (H, I)),
        b1=s * jax.random.normal(ks[5], (1, I), jnp.float32),
        w2=w(ks[6], (I, H)),
        b2=s * jax.random.normal(ks[7], (1, H), jnp.float32),
    )


# ------------------------- pure-JAX reference --------------------------------
def reference_block(x, p, num_heads):
    B, S, H = x.shape
    dh = H // num_heads

    def ln(v, g, b):
        mu = v.mean(-1, keepdims=True)
        var = ((v - mu) ** 2).mean(-1, keepdims=True)
        return (v - mu) / jnp.sqrt(var + LN_EPS) * g + b

    h = ln(x, p["ln1_g"][0], p["ln1_b"][0])
    qkv = h @ p["wqkv"] + p["bqkv"][0]
    q, k, v = jnp.split(qkv, 3, axis=-1)
    q = q.reshape(B, S, num_heads, dh).transpose(0, 2, 1, 3)
    k = k.reshape(B, S, num_heads, dh).transpose(0, 2, 1, 3)
    v = v.reshape(B, S, num_heads, dh).transpose(0, 2, 1, 3)
    scores = jnp.einsum("bhqd,bhkd->bhqk", q, k) / math.sqrt(dh)
    probs = jax.nn.softmax(scores, axis=-1)
    ao = jnp.einsum("bhqk,bhkd->bhqd", probs, v).transpose(0, 2, 1, 3).reshape(B, S, H)
    ao = ao @ p["wo"] + p["bo"][0]
    x1 = x + ao
    h2 = ln(x1, p["ln2_g"][0], p["ln2_b"][0])
    m = h2 @ p["w1"] + p["b1"][0]
    m = 0.5 * m * (1.0 + jnp.tanh(math.sqrt(2.0 / math.pi) * (m + 0.044715 * m ** 3)))
    m = m @ p["w2"] + p["b2"][0]
    return x1 + m


# ------------------------- main ----------------------------------------------
if __name__ == "__main__":
    cfg = CONFIG
    H = cfg["hidden_size"]
    NH = cfg["num_attention_heads"]
    I = cfg["intermediate_size"]
    L = cfg["num_hidden_layers"]

    B, S = 2, 8  # small batch / sequence length

    key = jax.random.PRNGKey(0)
    key, xk = jax.random.split(key)
    x = jax.random.normal(xk, (B, S, H), jnp.float32)

    layer_keys = jax.random.split(key, L)
    all_params = [init_block_params(layer_keys[i], H, I) for i in range(L)]

    out = encoder_forward(x, all_params, num_heads=NH, batch_tile=1)
    out = jax.block_until_ready(out)

    # cross-check against a pure-JAX f32 reference of the PyTorch forward pass
    ref = x
    for p in all_params:
        ref = reference_block(ref, p, NH)

    assert out.shape == (B, S, H)
    max_err = float(jnp.max(jnp.abs(out - ref)))
    # tolerance accounts for bf16 MXU operands and approx-reciprocal softmax
    assert jnp.allclose(out, ref, atol=2e-3, rtol=2e-3), max_err

    print("KERNEL_OK")
</pallas_src>

<mosaic_0001>
module attributes {stable_mosaic.version = 11 : i64} {
  func.func @encoder_kernel(%arg0: i32, %arg1: i32, %arg2: memref<8x32xf32, #tpu.memory_space<vmem>>, %arg3: memref<1x1x32xf32, #tpu.memory_space<vmem>>, %arg4: memref<1x1x32xf32, #tpu.memory_space<vmem>>, %arg5: memref<1x32x96xbf16, #tpu.memory_space<vmem>>, %arg6: memref<1x1x96xf32, #tpu.memory_space<vmem>>, %arg7: memref<1x32x32xbf16, #tpu.memory_space<vmem>>, %arg8: memref<1x1x32xf32, #tpu.memory_space<vmem>>, %arg9: memref<1x1x32xf32, #tpu.memory_space<vmem>>, %arg10: memref<1x1x32xf32, #tpu.memory_space<vmem>>, %arg11: memref<1x32x64xbf16, #tpu.memory_space<vmem>>, %arg12: memref<1x1x64xf32, #tpu.memory_space<vmem>>, %arg13: memref<1x64x32xbf16, #tpu.memory_space<vmem>>, %arg14: memref<1x1x32xf32, #tpu.memory_space<vmem>>, %arg15: memref<8x32xf32, #tpu.memory_space<vmem>>) attributes {dimension_semantics = [#tpu.dimension_semantics<parallel>, #tpu.dimension_semantics<arbitrary>], iteration_bounds = array<i64: 2, 2>, scalar_prefetch = 0 : i64, scratch_operands = 0 : i64, tpu.core_type = #tpu.core_type<tc>, window_params = [{transform_indices = @transform_0, window_bounds = array<i64: 8, 32>}, {transform_indices = @transform_1, window_bounds = array<i64: 1, 1, 32>}, {transform_indices = @transform_2, window_bounds = array<i64: 1, 1, 32>}, {transform_indices = @transform_3, window_bounds = array<i64: 1, 32, 96>}, {transform_indices = @transform_4, window_bounds = array<i64: 1, 1, 96>}, {transform_indices = @transform_5, window_bounds = array<i64: 1, 32, 32>}, {transform_indices = @transform_6, window_bounds = array<i64: 1, 1, 32>}, {transform_indices = @transform_7, window_bounds = array<i64: 1, 1, 32>}, {transform_indices = @transform_8, window_bounds = array<i64: 1, 1, 32>}, {transform_indices = @transform_9, window_bounds = array<i64: 1, 32, 64>}, {transform_indices = @transform_10, window_bounds = array<i64: 1, 1, 64>}, {transform_indices = @transform_11, window_bounds = array<i64: 1, 64, 32>}, {transform_indices = @transform_12, window_bounds = array<i64: 1, 1, 32>}, {transform_indices = @transform_13, window_bounds = array<i64: 8, 32>}]} {
    %c0_i32 = arith.constant 0 : i32
    %0 = arith.cmpi eq, %arg1, %c0_i32 : i32
    %1 = arith.extui %0 : i1 to i32
    %c0_i32_0 = arith.constant 0 : i32
    %2 = arith.cmpi ne, %1, %c0_i32_0 : i32
    scf.if %2 {
      %c0_61 = arith.constant 0 : index
      %c0_62 = arith.constant 0 : index
      %147 = vector.load %arg2[%c0_61, %c0_62] : memref<8x32xf32, #tpu.memory_space<vmem>>, vector<8x32xf32>
      %c0_63 = arith.constant 0 : index
      %c0_64 = arith.constant 0 : index
      %148 = vector.load %arg15[%c0_63, %c0_64] : memref<8x32xf32, #tpu.memory_space<vmem>>, vector<8x32xf32>
      tpu.vector_store %arg15[%c0_63, %c0_64], %147 {strides = array<i32>} : memref<8x32xf32, #tpu.memory_space<vmem>>, vector<8x32xf32>,
    } else {
    }
    %c0 = arith.constant 0 : index
    %c0_1 = arith.constant 0 : index
    %3 = vector.load %arg15[%c0, %c0_1] : memref<8x32xf32, #tpu.memory_space<vmem>>, vector<8x32xf32>
    %c0_2 = arith.constant 0 : index
    %c0_3 = arith.constant 0 : index
    %c0_4 = arith.constant 0 : index
    %4 = vector.load %arg3[%c0_2, %c0_3, %c0_4] : memref<1x1x32xf32, #tpu.memory_space<vmem>>, vector<1x1x32xf32>
    %5 = vector.shape_cast %4 : vector<1x1x32xf32> to vector<1x32xf32>
    %c0_5 = arith.constant 0 : index
    %c0_6 = arith.constant 0 : index
    %c0_7 = arith.constant 0 : index
    %6 = vector.load %arg4[%c0_5, %c0_6, %c0_7] : memref<1x1x32xf32, #tpu.memory_space<vmem>>, vector<1x1x32xf32>
    %7 = vector.shape_cast %6 : vector<1x1x32xf32> to vector<1x32xf32>
    %c0_8 = arith.constant 0 : index
    %c0_9 = arith.constant 0 : index
    %c0_10 = arith.constant 0 : index
    %8 = vector.load %arg9[%c0_8, %c0_9, %c0_10] : memref<1x1x32xf32, #tpu.memory_space<vmem>>, vector<1x1x32xf32>
    %9 = vector.shape_cast %8 : vector<1x1x32xf32> to vector<1x32xf32>
    %c0_11 = arith.constant 0 : index
    %c0_12 = arith.constant 0 : index
    %c0_13 = arith.constant 0 : index
    %10 = vector.load %arg10[%c0_11, %c0_12, %c0_13] : memref<1x1x32xf32, #tpu.memory_space<vmem>>, vector<1x1x32xf32>
    %11 = vector.shape_cast %10 : vector<1x1x32xf32> to vector<1x32xf32>
    %c0_14 = arith.constant 0 : index
    %c0_15 = arith.constant 0 : index
    %c0_16 = arith.constant 0 : index
    %12 = vector.load %arg5[%c0_14, %c0_15, %c0_16] : memref<1x32x96xbf16, #tpu.memory_space<vmem>>, vector<1x32x96xbf16>
    %13 = vector.shape_cast %12 : vector<1x32x96xbf16> to vector<32x96xbf16>
    %c0_17 = arith.constant 0 : index
    %c0_18 = arith.constant 0 : index
    %c0_19 = arith.constant 0 : index
    %14 = vector.load %arg6[%c0_17, %c0_18, %c0_19] : memref<1x1x96xf32, #tpu.memory_space<vmem>>, vector<1x1x96xf32>
    %15 = vector.shape_cast %14 : vector<1x1x96xf32> to vector<1x96xf32>
    %c0_20 = arith.constant 0 : index
    %c0_21 = arith.constant 0 : index
    %c0_22 = arith.constant 0 : index
    %16 = vector.load %arg7[%c0_20, %c0_21, %c0_22] : memref<1x32x32xbf16, #tpu.memory_space<vmem>>, vector<1x32x32xbf16>
    %17 = vector.shape_cast %16 : vector<1x32x32xbf16> to vector<32x32xbf16>
    %c0_23 = arith.constant 0 : index
    %c0_24 = arith.constant 0 : index
    %c0_25 = arith.constant 0 : index
    %18 = vector.load %arg8[%c0_23, %c0_24, %c0_25] : memref<1x1x32xf32, #tpu.memory_space<vmem>>, vector<1x1x32xf32>
    %19 = vector.shape_cast %18 : vector<1x1x32xf32> to vector<1x32xf32>
    %c0_26 = arith.constant 0 : index
    %c0_27 = arith.constant 0 : index
    %c0_28 = arith.constant 0 : index
    %20 = vector.load %arg11[%c0_26, %c0_27, %c0_28] : memref<1x32x64xbf16, #tpu.memory_space<vmem>>, vector<1x32x64xbf16>
    %21 = vector.shape_cast %20 : vector<1x32x64xbf16> to vector<32x64xbf16>
    %c0_29 = arith.constant 0 : index
    %c0_30 = arith.constant 0 : index
    %c0_31 = arith.constant 0 : index
    %22 = vector.load %arg12[%c0_29, %c0_30, %c0_31] : memref<1x1x64xf32, #tpu.memory_space<vmem>>, vector<1x1x64xf32>
    %23 = vector.shape_cast %22 : vector<1x1x64xf32> to vector<1x64xf32>
    %c0_32 = arith.constant 0 : index
    %c0_33 = arith.constant 0 : index
    %c0_34 = arith.constant 0 : index
    %24 = vector.load %arg13[%c0_32, %c0_33, %c0_34] : memref<1x64x32xbf16, #tpu.memory_space<vmem>>, vector<1x64x32xbf16>
    %25 = vector.shape_cast %24 : vector<1x64x32xbf16> to vector<64x32xbf16>
    %c0_35 = arith.constant 0 : index
    %c0_36 = arith.constant 0 : index
    %c0_37 = arith.constant 0 : index
    %26 = vector.load %arg14[%c0_35, %c0_36, %c0_37] : memref<1x1x32xf32, #tpu.memory_space<vmem>>, vector<1x1x32xf32>
    %27 = vector.shape_cast %26 : vector<1x1x32xf32> to vector<1x32xf32>
    %cst = arith.constant dense<0.000000e+00> : vector<8xf32>
    %28 = vector.multi_reduction <add>, %3, %cst [1] : vector<8x32xf32> to vector<8xf32>
    %29 = vector.shape_cast %28 : vector<8xf32> to vector<8x1xf32>
    %cst_38 = arith.constant 3.200000e+01 : f32
    %30 = vector.broadcast %cst_38 : f32 to vector<8x1xf32>
    %31 = arith.divf %29, %30 : vector<8x1xf32>
    %32 = vector.broadcast %31 : vector<8x1xf32> to vector<8x32xf32>
    %33 = arith.subf %3, %32 : vector<8x32xf32>
    %34 = arith.mulf %33, %33 : vector<8x32xf32>
    %cst_39 = arith.constant dense<0.000000e+00> : vector<8xf32>
    %35 = vector.multi_reduction <add>, %34, %cst_39 [1] : vector<8x32xf32> to vector<8xf32>
    %36 = vector.shape_cast %35 : vector<8xf32> to vector<8x1xf32>
    %cst_40 = arith.constant 3.200000e+01 : f32
    %37 = vector.broadcast %cst_40 : f32 to vector<8x1xf32>
    %38 = arith.divf %36, %37 : vector<8x1xf32>
    %39 = vector.broadcast %31 : vector<8x1xf32> to vector<8x32xf32>
    %40 = arith.subf %3, %39 : vector<8x32xf32>
    %cst_41 = arith.constant 9.99999974E-6 : f32
    %41 = vector.broadcast %cst_41 : f32 to vector<8x1xf32>
    %42 = arith.addf %38, %41 : vector<8x1xf32>
    %43 = math.rsqrt %42 : vector<8x1xf32>
    %44 = vector.broadcast %43 : vector<8x1xf32> to vector<8x32xf32>
    %45 = arith.mulf %40, %44 : vector<8x32xf32>
    %46 = vector.broadcast %5 : vector<1x32xf32> to vector<8x32xf32>
    %47 = arith.mulf %45, %46 : vector<8x32xf32>
    %48 = vector.broadcast %7 : vector<1x32xf32> to vector<8x32xf32>
    %49 = arith.addf %47, %48 : vector<8x32xf32>
    %50 = arith.truncf %49 : vector<8x32xf32> to vector<8x32xbf16>
    %cst_42 = arith.constant dense<0.000000e+00> : vector<8x96xf32>
    %51 = tpu.matmul %50, %13, %cst_42 {dimension_numbers = #tpu.dot_dimension_numbers<[1], [0], [0], [1], [0, 0, 1, 1], [], []>} : vector<8x32xbf16>, vector<32x96xbf16>, vector<8x96xf32> -> vector<8x96xf32>
    %52 = vector.broadcast %15 : vector<1x96xf32> to vector<8x96xf32>
    %53 = arith.addf %51, %52 : vector<8x96xf32>
    %54 = vector.extract_strided_slice %53 {offsets = [0, 0], sizes = [8, 32], strides = [1, 1]} : vector<8x96xf32> to vector<8x32xf32>
    %55 = vector.shape_cast %54 : vector<8x32xf32> to vector<1x8x32xf32>
    %56 = vector.extract_strided_slice %55 {offsets = [0, 0, 0], sizes = [1, 8, 8], strides = [1, 1, 1]} : vector<1x8x32xf32> to vector<1x8x8xf32>
    %57 = vector.extract_strided_slice %55 {offsets = [0, 0, 8], sizes = [1, 8, 8], strides = [1, 1, 1]} : vector<1x8x32xf32> to vector<1x8x8xf32>
    %58 = vector.extract_strided_slice %55 {offsets = [0, 0, 16], sizes = [1, 8, 8], strides = [1, 1, 1]} : vector<1x8x32xf32> to vector<1x8x8xf32>
    %59 = vector.extract_strided_slice %55 {offsets = [0, 0, 24], sizes = [1, 8, 8], strides = [1, 1, 1]} : vector<1x8x32xf32> to vector<1x8x8xf32>
    %60 = tpu.concatenate %56, %57, %58, %59 in 0 : vector<1x8x8xf32>, vector<1x8x8xf32>, vector<1x8x8xf32>, vector<1x8x8xf32> -> vector<4x8x8xf32>
    %61 = arith.truncf %60 : vector<4x8x8xf32> to vector<4x8x8xbf16>
    %62 = vector.extract_strided_slice %53 {offsets = [0, 32], sizes = [8, 32], strides = [1, 1]} : vector<8x96xf32> to vector<8x32xf32>
    %63 = vector.shape_cast %62 : vector<8x32xf32> to vector<1x8x32xf32>
    %64 = vector.extract_strided_slice %63 {offsets = [0, 0, 0], sizes = [1, 8, 8], strides = [1, 1, 1]} : vector<1x8x32xf32> to vector<1x8x8xf32>
    %65 = vector.extract_strided_slice %63 {offsets = [0, 0, 8], sizes = [1, 8, 8], strides = [1, 1, 1]} : vector<1x8x32xf32> to vector<1x8x8xf32>
    %66 = vector.extract_strided_slice %63 {offsets = [0, 0, 16], sizes = [1, 8, 8], strides = [1, 1, 1]} : vector<1x8x32xf32> to vector<1x8x8xf32>
    %67 = vector.extract_strided_slice %63 {offsets = [0, 0, 24], sizes = [1, 8, 8], strides = [1, 1, 1]} : vector<1x8x32xf32> to vector<1x8x8xf32>
    %68 = tpu.concatenate %64, %65, %66, %67 in 0 : vector<1x8x8xf32>, vector<1x8x8xf32>, vector<1x8x8xf32>, vector<1x8x8xf32> -> vector<4x8x8xf32>
    %69 = arith.truncf %68 : vector<4x8x8xf32> to vector<4x8x8xbf16>
    %70 = vector.extract_strided_slice %53 {offsets = [0, 64], sizes = [8, 32], strides = [1, 1]} : vector<8x96xf32> to vector<8x32xf32>
    %71 = vector.shape_cast %70 : vector<8x32xf32> to vector<1x8x32xf32>
    %72 = vector.extract_strided_slice %71 {offsets = [0, 0, 0], sizes = [1, 8, 8], strides = [1, 1, 1]} : vector<1x8x32xf32> to vector<1x8x8xf32>
    %73 = vector.extract_strided_slice %71 {offsets = [0, 0, 8], sizes = [1, 8, 8], strides = [1, 1, 1]} : vector<1x8x32xf32> to vector<1x8x8xf32>
    %74 = vector.extract_strided_slice %71 {offsets = [0, 0, 16], sizes = [1, 8, 8], strides = [1, 1, 1]} : vector<1x8x32xf32> to vector<1x8x8xf32>
    %75 = vector.extract_strided_slice %71 {offsets = [0, 0, 24], sizes = [1, 8, 8], strides = [1, 1, 1]} : vector<1x8x32xf32> to vector<1x8x8xf32>
    %76 = tpu.concatenate %72, %73, %74, %75 in 0 : vector<1x8x8xf32>, vector<1x8x8xf32>, vector<1x8x8xf32>, vector<1x8x8xf32> -> vector<4x8x8xf32>
    %77 = arith.truncf %76 : vector<4x8x8xf32> to vector<4x8x8xbf16>
    "tpu.trace_start"() <{level = 10 : i32, message = "bqd,bkd->bqk"}> : () -> ()
    %cst_43 = arith.constant dense<0.000000e+00> : vector<4x8x8xf32>
    %78 = tpu.matmul %61, %69, %cst_43 {dimension_numbers = #tpu.dot_dimension_numbers<[2], [2], [1], [1], [0, 0, 0, 1, 1, 1], [0], [0]>} : vector<4x8x8xbf16>, vector<4x8x8xbf16>, vector<4x8x8xf32> -> vector<4x8x8xf32>
    "tpu.trace_stop"() : () -> ()
    %cst_44 = arith.constant dense<0xFF800000> : vector<4x8xf32>
    %79 = vector.multi_reduction <maximumf>, %78, %cst_44 [2] : vector<4x8x8xf32> to vector<4x8xf32>
    %80 = vector.shape_cast %79 : vector<4x8xf32> to vector<4x8x1xf32>
    %81 = vector.broadcast %80 : vector<4x8x1xf32> to vector<4x8x8xf32>
    %82 = arith.subf %78, %81 : vector<4x8x8xf32>
    %83 = math.exp %82 : vector<4x8x8xf32>
    %cst_45 = arith.constant dense<0.000000e+00> : vector<4x8xf32>
    %84 = vector.multi_reduction <add>, %83, %cst_45 [2] : vector<4x8x8xf32> to vector<4x8xf32>
    %85 = vector.shape_cast %84 : vector<4x8xf32> to vector<4x8x1xf32>
    %86 = tpu.reciprocal %85 {approx = true} : vector<4x8x1xf32> -> vector<4x8x1xf32>
    %87 = vector.broadcast %86 : vector<4x8x1xf32> to vector<4x8x8xf32>
    %88 = arith.mulf %83, %87 : vector<4x8x8xf32>
    %89 = arith.truncf %88 : vector<4x8x8xf32> to vector<4x8x8xbf16>
    "tpu.trace_start"() <{level = 10 : i32, message = "bqk,bkd->bqd"}> : () -> ()
    %cst_46 = arith.constant dense<0.000000e+00> : vector<4x8x8xf32>
    %90 = tpu.matmul %89, %77, %cst_46 {dimension_numbers = #tpu.dot_dimension_numbers<[2], [1], [1], [2], [0, 0, 0, 1, 1, 2], [0], [0]>} : vector<4x8x8xbf16>, vector<4x8x8xbf16>, vector<4x8x8xf32> -> vector<4x8x8xf32>
    "tpu.trace_stop"() : () -> ()
    %91 = vector.extract_strided_slice %90 {offsets = [0, 0, 0], sizes = [1, 8, 8], strides = [1, 1, 1]} : vector<4x8x8xf32> to vector<1x8x8xf32>
    %92 = vector.extract_strided_slice %90 {offsets = [1, 0, 0], sizes = [1, 8, 8], strides = [1, 1, 1]} : vector<4x8x8xf32> to vector<1x8x8xf32>
    %93 = vector.extract_strided_slice %90 {offsets = [2, 0, 0], sizes = [1, 8, 8], strides = [1, 1, 1]} : vector<4x8x8xf32> to vector<1x8x8xf32>
    %94 = vector.extract_strided_slice %90 {offsets = [3, 0, 0], sizes = [1, 8, 8], strides = [1, 1, 1]} : vector<4x8x8xf32> to vector<1x8x8xf32>
    %95 = tpu.concatenate %91, %92, %93, %94 in 2 : vector<1x8x8xf32>, vector<1x8x8xf32>, vector<1x8x8xf32>, vector<1x8x8xf32> -> vector<1x8x32xf32>
    %96 = vector.shape_cast %95 : vector<1x8x32xf32> to vector<8x32xf32>
    %97 = arith.truncf %96 : vector<8x32xf32> to vector<8x32xbf16>
    %cst_47 = arith.constant dense<0.000000e+00> : vector<8x32xf32>
    %98 = tpu.matmul %97, %17, %cst_47 {dimension_numbers = #tpu.dot_dimension_numbers<[1], [0], [0], [1], [0, 0, 1, 1], [], []>} : vector<8x32xbf16>, vector<32x32xbf16>, vector<8x32xf32> -> vector<8x32xf32>
    %99 = vector.broadcast %19 : vector<1x32xf32> to vector<8x32xf32>
    %100 = arith.addf %98, %99 : vector<8x32xf32>
    %101 = arith.addf %3, %100 : vector<8x32xf32>
    %cst_48 = arith.constant dense<0.000000e+00> : vector<8xf32>
    %102 = vector.multi_reduction <add>, %101, %cst_48 [1] : vector<8x32xf32> to vector<8xf32>
    %103 = vector.shape_cast %102 : vector<8xf32> to vector<8x1xf32>
    %cst_49 = arith.constant 3.200000e+01 : f32
    %104 = vector.broadcast %cst_49 : f32 to vector<8x1xf32>
    %105 = arith.divf %103, %104 : vector<8x1xf32>
    %106 = vector.broadcast %105 : vector<8x1xf32> to vector<8x32xf32>
    %107 = arith.subf %101, %106 : vector<8x32xf32>
    %108 = arith.mulf %107, %107 : vector<8x32xf32>
    %cst_50 = arith.constant dense<0.000000e+00> : vector<8xf32>
    %109 = vector.multi_reduction <add>, %108, %cst_50 [1] : vector<8x32xf32> to vector<8xf32>
    %110 = vector.shape_cast %109 : vector<8xf32> to vector<8x1xf32>
    %cst_51 = arith.constant 3.200000e+01 : f32
    %111 = vector.broadcast %cst_51 : f32 to vector<8x1xf32>
    %112 = arith.divf %110, %111 : vector<8x1xf32>
    %113 = vector.broadcast %105 : vector<8x1xf32> to vector<8x32xf32>
    %114 = arith.subf %101, %113 : vector<8x32xf32>
    %cst_52 = arith.constant 9.99999974E-6 : f32
    %115 = vector.broadcast %cst_52 : f32 to vector<8x1xf32>
    %116 = arith.addf %112, %115 : vector<8x1xf32>
    %117 = math.rsqrt %116 : vector<8x1xf32>
    %118 = vector.broadcast %117 : vector<8x1xf32> to vector<8x32xf32>
    %119 = arith.mulf %114, %118 : vector<8x32xf32>
    %120 = vector.broadcast %9 : vector<1x32xf32> to vector<8x32xf32>
    %121 = arith.mulf %119, %120 : vector<8x32xf32>
    %122 = vector.broadcast %11 : vector<1x32xf32> to vector<8x32xf32>
    %123 = arith.addf %121, %122 : vector<8x32xf32>
    %124 = arith.truncf %123 : vector<8x32xf32> to vector<8x32xbf16>
    %cst_53 = arith.constant dense<0.000000e+00> : vector<8x64xf32>
    %125 = tpu.matmul %124, %21, %cst_53 {dimension_numbers = #tpu.dot_dimension_numbers<[1], [0], [0], [1], [0, 0, 1, 1], [], []>} : vector<8x32xbf16>, vector<32x64xbf16>, vector<8x64xf32> -> vector<8x64xf32>
    %126 = vector.broadcast %23 : vector<1x64xf32> to vector<8x64xf32>
    %127 = arith.addf %125, %126 : vector<8x64xf32>
    %cst_54 = arith.constant 5.000000e-01 : f32
    %128 = vector.broadcast %cst_54 : f32 to vector<8x64xf32>
    %129 = arith.mulf %128, %127 : vector<8x64xf32>
    %130 = arith.mulf %127, %127 : vector<8x64xf32>
    %131 = arith.mulf %130, %127 : vector<8x64xf32>
    %cst_55 = arith.constant 4.471500e-02 : f32
    %132 = vector.broadcast %cst_55 : f32 to vector<8x64xf32>
    %133 = arith.mulf %132, %131 : vector<8x64xf32>
    %134 = arith.addf %127, %133 : vector<8x64xf32>
    %cst_56 = arith.constant 0.797884583 : f32
    %135 = vector.broadcast %cst_56 : f32 to vector<8x64xf32>
    %136 = arith.mulf %135, %134 : vector<8x64xf32>
    %137 = math.tanh %136 : vector<8x64xf32>
    %cst_57 = arith.constant 1.000000e+00 : f32
    %138 = vector.broadcast %cst_57 : f32 to vector<8x64xf32>
    %139 = arith.addf %138, %137 : vector<8x64xf32>
    %140 = arith.mulf %129, %139 : vector<8x64xf32>
    %141 = arith.truncf %140 : vector<8x64xf32> to vector<8x64xbf16>
    %cst_58 = arith.constant dense<0.000000e+00> : vector<8x32xf32>
    %142 = tpu.matmul %141, %25, %cst_58 {dimension_numbers = #tpu.dot_dimension_numbers<[1], [0], [0], [1], [0, 0, 1, 1], [], []>} : vector<8x64xbf16>, vector<64x32xbf16>, vector<8x32xf32> -> vector<8x32xf32>
    %143 = vector.broadcast %27 : vector<1x32xf32> to vector<8x32xf32>
    %144 = arith.addf %142, %143 : vector<8x32xf32>
    %145 = arith.addf %101, %144 : vector<8x32xf32>
    %c0_59 = arith.constant 0 : index
    %c0_60 = arith.constant 0 : index
    %146 = vector.load %arg15[%c0_59, %c0_60] : memref<8x32xf32, #tpu.memory_space<vmem>>, vector<8x32xf32>
    tpu.vector_store %arg15[%c0_59, %c0_60], %145 {strides = array<i32>} : memref<8x32xf32, #tpu.memory_space<vmem>>, vector<8x32xf32>,
    return
  }
  func.func @transform_0(%arg0: i32, %arg1: i32) -> (i32, i32) {
    %c0_i32 = arith.constant 0 : i32
    %c0_i32_0 = arith.constant 0 : i32
    return %arg0, %c0_i32 : i32, i32
  }
  func.func @transform_1(%arg0: i32, %arg1: i32) -> (i32, i32, i32) {
    %c0_i32 = arith.constant 0 : i32
    %c0_i32_0 = arith.constant 0 : i32
    %c0_i32_1 = arith.constant 0 : i32
    return %arg1, %c0_i32, %c0_i32_0 : i32, i32, i32
  }
  func.func @transform_2(%arg0: i32, %arg1: i32) -> (i32, i32, i32) {
    %c0_i32 = arith.constant 0 : i32
    %c0_i32_0 = arith.constant 0 : i32
    %c0_i32_1 = arith.constant 0 : i32
    return %arg1, %c0_i32, %c0_i32_0 : i32, i32, i32
  }
  func.func @transform_3(%arg0: i32, %arg1: i32) -> (i32, i32, i32) {
    %c0_i32 = arith.constant 0 : i32
    %c0_i32_0 = arith.constant 0 : i32
    %c0_i32_1 = arith.constant 0 : i32
    return %arg1, %c0_i32, %c0_i32_0 : i32, i32, i32
  }
  func.func @transform_4(%arg0: i32, %arg1: i32) -> (i32, i32, i32) {
    %c0_i32 = arith.constant 0 : i32
    %c0_i32_0 = arith.constant 0 : i32
    %c0_i32_1 = arith.constant 0 : i32
    return %arg1, %c0_i32, %c0_i32_0 : i32, i32, i32
  }
  func.func @transform_5(%arg0: i32, %arg1: i32) -> (i32, i32, i32) {
    %c0_i32 = arith.constant 0 : i32
    %c0_i32_0 = arith.constant 0 : i32
    %c0_i32_1 = arith.constant 0 : i32
    return %arg1, %c0_i32, %c0_i32_0 : i32, i32, i32
  }
  func.func @transform_6(%arg0: i32, %arg1: i32) -> (i32, i32, i32) {
    %c0_i32 = arith.constant 0 : i32
    %c0_i32_0 = arith.constant 0 : i32
    %c0_i32_1 = arith.constant 0 : i32
    return %arg1, %c0_i32, %c0_i32_0 : i32, i32, i32
  }
  func.func @transform_7(%arg0: i32, %arg1: i32) -> (i32, i32, i32) {
    %c0_i32 = arith.constant 0 : i32
    %c0_i32_0 = arith.constant 0 : i32
    %c0_i32_1 = arith.constant 0 : i32
    return %arg1, %c0_i32, %c0_i32_0 : i32, i32, i32
  }
  func.func @transform_8(%arg0: i32, %arg1: i32) -> (i32, i32, i32) {
    %c0_i32 = arith.constant 0 : i32
    %c0_i32_0 = arith.constant 0 : i32
    %c0_i32_1 = arith.constant 0 : i32
    return %arg1, %c0_i32, %c0_i32_0 : i32, i32, i32
  }
  func.func @transform_9(%arg0: i32, %arg1: i32) -> (i32, i32, i32) {
    %c0_i32 = arith.constant 0 : i32
    %c0_i32_0 = arith.constant 0 : i32
    %c0_i32_1 = arith.constant 0 : i32
    return %arg1, %c0_i32, %c0_i32_0 : i32, i32, i32
  }
  func.func @transform_10(%arg0: i32, %arg1: i32) -> (i32, i32, i32) {
    %c0_i32 = arith.constant 0 : i32
    %c0_i32_0 = arith.constant 0 : i32
    %c0_i32_1 = arith.constant 0 : i32
    return %arg1, %c0_i32, %c0_i32_0 : i32, i32, i32
  }
  func.func @transform_11(%arg0: i32, %arg1: i32) -> (i32, i32, i32) {
    %c0_i32 = arith.constant 0 : i32
    %c0_i32_0 = arith.constant 0 : i32
    %c0_i32_1 = arith.constant 0 : i32
    return %arg1, %c0_i32, %c0_i32_0 : i32, i32, i32
  }
  func.func @transform_12(%arg0: i32, %arg1: i32) -> (i32, i32, i32) {
    %c0_i32 = arith.constant 0 : i32
    %c0_i32_0 = arith.constant 0 : i32
    %c0_i32_1 = arith.constant 0 : i32
    return %arg1, %c0_i32, %c0_i32_0 : i32, i32, i32
  }
  func.func @transform_13(%arg0: i32, %arg1: i32) -> (i32, i32) {
    %c0_i32 = arith.constant 0 : i32
    %c0_i32_0 = arith.constant 0 : i32
    return %arg0, %c0_i32 : i32, i32
  }
}

</mosaic_0001>

<llo_original>
// kernel: tpu_custom_call.1
$region0: #{tpu_custom_call.1}
  #allocation0 [shape = 'u32[]', space=smem, size = 0x4, offset = 0x4, fixed_abs, tag = 'smem constant byte address 0x4 - core index']
  #allocation1 [shape = 'u32[144,128]{1,0:T(1,128)}', space=vmem, size = 0x12000, scoped, tag = 'internal scratch']
  %s0 = inlined_call_operand.hbm [shape: f32[16,32], index: 0, kind: input, shape index: {}]
  %s1 = inlined_call_operand.vmem [shape: f32[2,1,32], index: 1, kind: input, shape index: {}]
  %s2 = inlined_call_operand.vmem [shape: f32[2,1,32], index: 2, kind: input, shape index: {}]
  %s3 = inlined_call_operand.vmem [shape: bf16[2,32,96], index: 3, kind: input, shape index: {}]
  %s4 = inlined_call_operand.vmem [shape: f32[2,1,96], index: 4, kind: input, shape index: {}]
  %s5 = inlined_call_operand.vmem [shape: bf16[2,32,32], index: 5, kind: input, shape index: {}]
  %s6 = inlined_call_operand.vmem [shape: f32[2,1,32], index: 6, kind: input, shape index: {}]
  %s7 = inlined_call_operand.hbm [shape: f32[2,1,32], index: 7, kind: input, shape index: {}]
  %s8 = inlined_call_operand.hbm [shape: f32[2,1,32], index: 8, kind: input, shape index: {}]
  %s9 = inlined_call_operand.vmem [shape: bf16[2,32,64], index: 9, kind: input, shape index: {}]
  %s10 = inlined_call_operand.hbm [shape: f32[2,1,64], index: 10, kind: input, shape index: {}]
  %s11 = inlined_call_operand.vmem [shape: bf16[2,64,32], index: 11, kind: input, shape index: {}]
  %s12 = inlined_call_operand.vmem [shape: f32[2,1,32], index: 12, kind: input, shape index: {}]
  %s13 = inlined_call_operand.hbm [shape: f32[16,32], index: 13, kind: output, shape index: {}]
  %s14 = sld [smem:[#allocation0]]
  $region105: #{tpu_custom_call.1} parent=0
    _
  %s16 = ssub.s32 1, %s14
  %s17 = scalar_select 0, %s16, %s14
  $region1: #{tpu_custom_call.1} parent=0
    #allocation2 [shape = 'u8[8192]{0}', space=vmem, size = 0x2000, scoped, tag = 'input window, operand 0']
    #allocation3 [shape = 's32[2]{0}', space=sflag, size = 0x8, scoped, tag = 'scoped memory for tpu_custom_call.1']
    #allocation4 [shape = 's32[2]{0}', space=sflag, size = 0x8, scoped, tag = 'scoped memory for tpu_custom_call.1']
    #allocation5 [shape = 'u8[1024]{0}', space=vmem, size = 0x400, scoped, tag = 'input window, operand 7']
    #allocation6 [shape = 's32[2]{0}', space=sflag, size = 0x8, scoped, tag = 'scoped memory for tpu_custom_call.1']
    #allocation7 [shape = 'u8[1024]{0}', space=vmem, size = 0x400, scoped, tag = 'input window, operand 8']
    #allocation8 [shape = 'u8[1024]{0}', space=vmem, size = 0x400, scoped, tag = 'input window, operand 10']
    #allocation9 [shape = 's32[2]{0}', space=sflag, size = 0x8, scoped, tag = 'scoped memory for tpu_custom_call.1']
    #allocation10 [shape = 'u8[8192]{0}', space=vmem, size = 0x2000, scoped, tag = 'output window, operand 0']
    %18 = vsyncpa [#allocation3], 0
    %s19 = scalar_lea.sflag [#allocation3], 1
    %20 = vsyncpa %s19, 0
    %21 = vsyncpa [#allocation6], 0
    %s22 = scalar_lea.sflag [#allocation6], 1
    %23 = vsyncpa %s22, 0
    %24 = vsyncpa [#allocation9], 0
    %s25 = scalar_lea.sflag [#allocation9], 1
    %26 = vsyncpa %s25, 0
    %27 = vsyncpa [#allocation4], 0
    %s28 = scalar_lea.sflag [#allocation4], 1
    %29 = vsyncpa %s28, 0
    loop: start=0, step=1, limit=6
    $region2: #{tpu_custom_call.1} parent=1 // loop_pre_header
      _
    $region3: #{tpu_custom_call.1} parent=1 // loop_header
      %s31 = sphi 0, %s35
      %p32 = scmp.ge.s32.totalorder %s31, 6
      %s38 = sphi 0, %s50
      %s39 = sphi 0, %s46
      %s40 = sphi 0, %s38
      %s41 = sphi 0, %s39
      %s42 = sphi 0, %s40
      %s43 = sphi 0, %s41
      %s53 = sphi 0, %s55
      %s56 = sphi 0, %s53
      %s57 = sphi 0, %s56
      %s73 = sphi 0, %s57
      %s79 = sphi 0, %s81
      %s82 = sphi 0, %s79
      %s83 = sphi 0, %s82
      %s99 = sphi 0, %s83
      %s105 = sphi 0, %s107
      %s108 = sphi 0, %s105
      %s109 = sphi 0, %s108
      %s125 = sphi 0, %s109
      %s131 = sphi 0, %s133
      %s134 = sphi 0, %s131
      %s135 = sphi 0, %s134
      %s151 = sphi 0, %s135
      %s157 = sphi 0, %s159
      %s160 = sphi 0, %s157
      %s161 = sphi 0, %s160
      %s177 = sphi 0, %s161
      %s183 = sphi 0, %s185
      %s186 = sphi 0, %s183
      %s187 = sphi 0, %s186
      %s203 = sphi 0, %s187
      %s209 = sphi 0, %s211
      %s212 = sphi 0, %s209
      %s213 = sphi 0, %s212
      %s229 = sphi 0, %s213
      %s235 = sphi 0, %s237
      %s238 = sphi 0, %s235
      %s239 = sphi 0, %s238
      %s255 = sphi 0, %s239
      %s261 = sphi 0, %s263
      %s264 = sphi 0, %s261
      %s265 = sphi 0, %s264
      %s281 = sphi 0, %s265
      %s287 = sphi 0, %s289
      %s290 = sphi 0, %s287
      %s291 = sphi 0, %s290
      %s307 = sphi 0, %s291
      %s313 = sphi 0, %s315
      %s316 = sphi 0, %s313
      %s317 = sphi 0, %s316
      %s333 = sphi 0, %s317
      %s339 = sphi 0, %s341
      %s342 = sphi 0, %s339
      %s343 = sphi 0, %s342
      %s359 = sphi 0, %s343
      %s365 = sphi 0, %s367
      %s368 = sphi 0, %s365
      %s369 = sphi 0, %s368
      %s385 = sphi 0, %s369
      %s391 = sphi 0, %s393
      %s394 = sphi 0, %s391
      %s395 = sphi 0, %s394
      %s411 = sphi 0, %s395
    $region4: #{tpu_custom_call.1} parent=1 // loop_header_branch
      %34 = sbr.rel (%p32) target = $region8
    $region5: #{tpu_custom_call.1} parent=1 // loop_body
      %s36 = ssub.s32 %s31, 1
      %s37 = ssub.s32 %s31, 2
      %s44 = sadd.s32 1, %s39
      %p45 = scmp.ge.s32.totalorder %s44, 2
      %s46 = scalar_select %p45, 0, %s44
      %s47 = sadd.s32 1, %s38
      %s48 = scalar_select %p45, %s47, %s38
      %p49 = scmp.ge.s32.totalorder %s48, 2
      %s50 = scalar_select %p49, 0, %s48
      %s51 = ssub.s32 %s38, %s50
      %p52 = scmp.eq.s32.totalorder %s51, 0
      %s54 = sadd.s32 %s53, 1
      %s55 = scalar_select %p52, %s53, %s54
      %p58 = pneg %p52
      %p59 = scmp.eq.s32.totalorder %s31, 3
      %p60 = por %p58, %p59
      %p61 = scmp.ne.s32.totalorder %s53, %s56
      %p62 = scmp.eq.s32.totalorder %s31, 0
      %p63 = por %p61, %p62
      %p64 = scmp.ne.s32.totalorder %s53, %s56
      %p65 = scmp.eq.s32.totalorder %s36, 3
      %p66 = por %p64, %p65
      %p67 = scmp.ne.s32.totalorder %s56, %s57
      %p68 = scmp.eq.s32.totalorder %s36, 0
      %p69 = por %p67, %p68
      %p70 = scmp.ne.s32.totalorder %s56, %s57
      %p71 = scmp.eq.s32.totalorder %s37, 3
      %p72 = por %p70, %p71
      %p74 = scmp.ne.s32.totalorder %s57, %s73
      %p75 = scmp.eq.s32.totalorder %s37, 0
      %p76 = por %p74, %p75
      %s77 = ssub.s32 %s39, %s46
      %p78 = scmp.eq.s32.totalorder %s77, 0
      %s80 = sadd.s32 %s79, 1
      %s81 = scalar_select %p78, %s79, %s80
      %p84 = pneg %p78
      %p85 = scmp.eq.s32.totalorder %s31, 3
      %p86 = por %p84, %p85
      %p87 = scmp.ne.s32.totalorder %s79, %s82
      %p88 = scmp.eq.s32.totalorder %s31, 0
      %p89 = por %p87, %p88
      %p90 = scmp.ne.s32.totalorder %s79, %s82
      %p91 = scmp.eq.s32.totalorder %s36, 3
      %p92 = por %p90, %p91
      %p93 = scmp.ne.s32.totalorder %s82, %s83
      %p94 = scmp.eq.s32.totalorder %s36, 0
      %p95 = por %p93, %p94
      %p96 = scmp.ne.s32.totalorder %s82, %s83
      %p97 = scmp.eq.s32.totalorder %s37, 3
      %p98 = por %p96, %p97
      %p100 = scmp.ne.s32.totalorder %s83, %s99
      %p101 = scmp.eq.s32.totalorder %s37, 0
      %p102 = por %p100, %p101
      %s103 = ssub.s32 %s39, %s46
      %p104 = scmp.eq.s32.totalorder %s103, 0
      %s106 = sadd.s32 %s105, 1
      %s107 = scalar_select %p104, %s105, %s106
      %p110 = pneg %p104
      %p111 = scmp.eq.s32.totalorder %s31, 3
      %p112 = por %p110, %p111
      %p113 = scmp.ne.s32.totalorder %s105, %s108
      %p114 = scmp.eq.s32.totalorder %s31, 0
      %p115 = por %p113, %p114
      %p116 = scmp.ne.s32.totalorder %s105, %s108
      %p117 = scmp.eq.s32.totalorder %s36, 3
      %p118 = por %p116, %p117
      %p119 = scmp.ne.s32.totalorder %s108, %s109
      %p120 = scmp.eq.s32.totalorder %s36, 0
      %p121 = por %p119, %p120
      %p122 = scmp.ne.s32.totalorder %s108, %s109
      %p123 = scmp.eq.s32.totalorder %s37, 3
      %p124 = por %p122, %p123
      %p126 = scmp.ne.s32.totalorder %s109, %s125
      %p127 = scmp.eq.s32.totalorder %s37, 0
      %p128 = por %p126, %p127
      %s129 = ssub.s32 %s39, %s46
      %p130 = scmp.eq.s32.totalorder %s129, 0
      %s132 = sadd.s32 %s131, 1
      %s133 = scalar_select %p130, %s131, %s132
      %p136 = pneg %p130
      %p137 = scmp.eq.s32.totalorder %s31, 3
      %p138 = por %p136, %p137
      %p139 = scmp.ne.s32.totalorder %s131, %s134
      %p140 = scmp.eq.s32.totalorder %s31, 0
      %p141 = por %p139, %p140
      %p142 = scmp.ne.s32.totalorder %s131, %s134
      %p143 = scmp.eq.s32.totalorder %s36, 3
      %p144 = por %p142, %p143
      %p145 = scmp.ne.s32.totalorder %s134, %s135
      %p146 = scmp.eq.s32.totalorder %s36, 0
      %p147 = por %p145, %p146
      %p148 = scmp.ne.s32.totalorder %s134, %s135
      %p149 = scmp.eq.s32.totalorder %s37, 3
      %p150 = por %p148, %p149
      %p152 = scmp.ne.s32.totalorder %s135, %s151
      %p153 = scmp.eq.s32.totalorder %s37, 0
      %p154 = por %p152, %p153
      %s155 = ssub.s32 %s39, %s46
      %p156 = scmp.eq.s32.totalorder %s155, 0
      %s158 = sadd.s32 %s157, 1
      %s159 = scalar_select %p156, %s157, %s158
      %p162 = pneg %p156
      %p163 = scmp.eq.s32.totalorder %s31, 3
      %p164 = por %p162, %p163
      %p165 = scmp.ne.s32.totalorder %s157, %s160
      %p166 = scmp.eq.s32.totalorder %s31, 0
      %p167 = por %p165, %p166
      %p168 = scmp.ne.s32.totalorder %s157, %s160
      %p169 = scmp.eq.s32.totalorder %s36, 3
      %p170 = por %p168, %p169
      %p171 = scmp.ne.s32.totalorder %s160, %s161
      %p172 = scmp.eq.s32.totalorder %s36, 0
      %p173 = por %p171, %p172
      %p174 = scmp.ne.s32.totalorder %s160, %s161
      %p175 = scmp.eq.s32.totalorder %s37, 3
      %p176 = por %p174, %p175
      %p178 = scmp.ne.s32.totalorder %s161, %s177
      %p179 = scmp.eq.s32.totalorder %s37, 0
      %p180 = por %p178, %p179
      %s181 = ssub.s32 %s39, %s46
      %p182 = scmp.eq.s32.totalorder %s181, 0
      %s184 = sadd.s32 %s183, 1
      %s185 = scalar_select %p182, %s183, %s184
      %p188 = pneg %p182
      %p189 = scmp.eq.s32.totalorder %s31, 3
      %p190 = por %p188, %p189
      %p191 = scmp.ne.s32.totalorder %s183, %s186
      %p192 = scmp.eq.s32.totalorder %s31, 0
      %p193 = por %p191, %p192
      %p194 = scmp.ne.s32.totalorder %s183, %s186
      %p195 = scmp.eq.s32.totalorder %s36, 3
      %p196 = por %p194, %p195
      %p197 = scmp.ne.s32.totalorder %s186, %s187
      %p198 = scmp.eq.s32.totalorder %s36, 0
      %p199 = por %p197, %p198
      %p200 = scmp.ne.s32.totalorder %s186, %s187
      %p201 = scmp.eq.s32.totalorder %s37, 3
      %p202 = por %p200, %p201
      %p204 = scmp.ne.s32.totalorder %s187, %s203
      %p205 = scmp.eq.s32.totalorder %s37, 0
      %p206 = por %p204, %p205
      %s207 = ssub.s32 %s39, %s46
      %p208 = scmp.eq.s32.totalorder %s207, 0
      %s210 = sadd.s32 %s209, 1
      %s211 = scalar_select %p208, %s209, %s210
      %p214 = pneg %p208
      %p215 = scmp.eq.s32.totalorder %s31, 3
      %p216 = por %p214, %p215
      %p217 = scmp.ne.s32.totalorder %s209, %s212
      %p218 = scmp.eq.s32.totalorder %s31, 0
      %p219 = por %p217, %p218
      %p220 = scmp.ne.s32.totalorder %s209, %s212
      %p221 = scmp.eq.s32.totalorder %s36, 3
      %p222 = por %p220, %p221
      %p223 = scmp.ne.s32.totalorder %s212, %s213
      %p224 = scmp.eq.s32.totalorder %s36, 0
      %p225 = por %p223, %p224
      %p226 = scmp.ne.s32.totalorder %s212, %s213
      %p227 = scmp.eq.s32.totalorder %s37, 3
      %p228 = por %p226, %p227
      %p230 = scmp.ne.s32.totalorder %s213, %s229
      %p231 = scmp.eq.s32.totalorder %s37, 0
      %p232 = por %p230, %p231
      %s233 = ssub.s32 %s39, %s46
      %p234 = scmp.eq.s32.totalorder %s233, 0
      %s236 = sadd.s32 %s235, 1
      %s237 = scalar_select %p234, %s235, %s236
      %p240 = pneg %p234
      %p241 = scmp.eq.s32.totalorder %s31, 3
      %p242 = por %p240, %p241
      %p243 = scmp.ne.s32.totalorder %s235, %s238
      %p244 = scmp.eq.s32.totalorder %s31, 0
      %p245 = por %p243, %p244
      %p246 = scmp.ne.s32.totalorder %s235, %s238
      %p247 = scmp.eq.s32.totalorder %s36, 3
      %p248 = por %p246, %p247
      %p249 = scmp.ne.s32.totalorder %s238, %s239
      %p250 = scmp.eq.s32.totalorder %s36, 0
      %p251 = por %p249, %p250
      %p252 = scmp.ne.s32.totalorder %s238, %s239
      %p253 = scmp.eq.s32.totalorder %s37, 3
      %p254 = por %p252, %p253
      %p256 = scmp.ne.s32.totalorder %s239, %s255
      %p257 = scmp.eq.s32.totalorder %s37, 0
      %p258 = por %p256, %p257
      %s259 = ssub.s32 %s39, %s46
      %p260 = scmp.eq.s32.totalorder %s259, 0
      %s262 = sadd.s32 %s261, 1
      %s263 = scalar_select %p260, %s261, %s262
      %p266 = pneg %p260
      %p267 = scmp.eq.s32.totalorder %s31, 3
      %p268 = por %p266, %p267
      %p269 = scmp.ne.s32.totalorder %s261, %s264
      %p270 = scmp.eq.s32.totalorder %s31, 0
      %p271 = por %p269, %p270
      %p272 = scmp.ne.s32.totalorder %s261, %s264
      %p273 = scmp.eq.s32.totalorder %s36, 3
      %p274 = por %p272, %p273
      %p275 = scmp.ne.s32.totalorder %s264, %s265
      %p276 = scmp.eq.s32.totalorder %s36, 0
      %p277 = por %p275, %p276
      %p278 = scmp.ne.s32.totalorder %s264, %s265
      %p279 = scmp.eq.s32.totalorder %s37, 3
      %p280 = por %p278, %p279
      %p282 = scmp.ne.s32.totalorder %s265, %s281
      %p283 = scmp.eq.s32.totalorder %s37, 0
      %p284 = por %p282, %p283
      %s285 = ssub.s32 %s39, %s46
      %p286 = scmp.eq.s32.totalorder %s285, 0
      %s288 = sadd.s32 %s287, 1
      %s289 = scalar_select %p286, %s287, %s288
      %p292 = pneg %p286
      %p293 = scmp.eq.s32.totalorder %s31, 3
      %p294 = por %p292, %p293
      %p295 = scmp.ne.s32.totalorder %s287, %s290
      %p296 = scmp.eq.s32.totalorder %s31, 0
      %p297 = por %p295, %p296
      %p298 = scmp.ne.s32.totalorder %s287, %s290
      %p299 = scmp.eq.s32.totalorder %s36, 3
      %p300 = por %p298, %p299
      %p301 = scmp.ne.s32.totalorder %s290, %s291
      %p302 = scmp.eq.s32.totalorder %s36, 0
      %p303 = por %p301, %p302
      %p304 = scmp.ne.s32.totalorder %s290, %s291
      %p305 = scmp.eq.s32.totalorder %s37, 3
      %p306 = por %p304, %p305
      %p308 = scmp.ne.s32.totalorder %s291, %s307
      %p309 = scmp.eq.s32.totalorder %s37, 0
      %p310 = por %p308, %p309
      %s311 = ssub.s32 %s39, %s46
      %p312 = scmp.eq.s32.totalorder %s311, 0
      %s314 = sadd.s32 %s313, 1
      %s315 = scalar_select %p312, %s313, %s314
      %p318 = pneg %p312
      %p319 = scmp.eq.s32.totalorder %s31, 3
      %p320 = por %p318, %p319
      %p321 = scmp.ne.s32.totalorder %s313, %s316
      %p322 = scmp.eq.s32.totalorder %s31, 0
      %p323 = por %p321, %p322
      %p324 = scmp.ne.s32.totalorder %s313, %s316
      %p325 = scmp.eq.s32.totalorder %s36, 3
      %p326 = por %p324, %p325
      %p327 = scmp.ne.s32.totalorder %s316, %s317
      %p328 = scmp.eq.s32.totalorder %s36, 0
      %p329 = por %p327, %p328
      %p330 = scmp.ne.s32.totalorder %s316, %s317
      %p331 = scmp.eq.s32.totalorder %s37, 3
      %p332 = por %p330, %p331
      %p334 = scmp.ne.s32.totalorder %s317, %s333
      %p335 = scmp.eq.s32.totalorder %s37, 0
      %p336 = por %p334, %p335
      %s337 = ssub.s32 %s39, %s46
      %p338 = scmp.eq.s32.totalorder %s337, 0
      %s340 = sadd.s32 %s339, 1
      %s341 = scalar_select %p338, %s339, %s340
      %p344 = pneg %p338
      %p345 = scmp.eq.s32.totalorder %s31, 3
      %p346 = por %p344, %p345
      %p347 = scmp.ne.s32.totalorder %s339, %s342
      %p348 = scmp.eq.s32.totalorder %s31, 0
      %p349 = por %p347, %p348
      %p350 = scmp.ne.s32.totalorder %s339, %s342
      %p351 = scmp.eq.s32.totalorder %s36, 3
      %p352 = por %p350, %p351
      %p353 = scmp.ne.s32.totalorder %s342, %s343
      %p354 = scmp.eq.s32.totalorder %s36, 0
      %p355 = por %p353, %p354
      %p356 = scmp.ne.s32.totalorder %s342, %s343
      %p357 = scmp.eq.s32.totalorder %s37, 3
      %p358 = por %p356, %p357
      %p360 = scmp.ne.s32.totalorder %s343, %s359
      %p361 = scmp.eq.s32.totalorder %s37, 0
      %p362 = por %p360, %p361
      %s363 = ssub.s32 %s39, %s46
      %p364 = scmp.eq.s32.totalorder %s363, 0
      %s366 = sadd.s32 %s365, 1
      %s367 = scalar_select %p364, %s365, %s366
      %p370 = pneg %p364
      %p371 = scmp.eq.s32.totalorder %s31, 3
      %p372 = por %p370, %p371
      %p373 = scmp.ne.s32.totalorder %s365, %s368
      %p374 = scmp.eq.s32.totalorder %s31, 0
      %p375 = por %p373, %p374
      %p376 = scmp.ne.s32.totalorder %s365, %s368
      %p377 = scmp.eq.s32.totalorder %s36, 3
      %p378 = por %p376, %p377
      %p379 = scmp.ne.s32.totalorder %s368, %s369
      %p380 = scmp.eq.s32.totalorder %s36, 0
      %p381 = por %p379, %p380
      %p382 = scmp.ne.s32.totalorder %s368, %s369
      %p383 = scmp.eq.s32.totalorder %s37, 3
      %p384 = por %p382, %p383
      %p386 = scmp.ne.s32.totalorder %s369, %s385
      %p387 = scmp.eq.s32.totalorder %s37, 0
      %p388 = por %p386, %p387
      %s389 = ssub.s32 %s38, %s50
      %p390 = scmp.eq.s32.totalorder %s389, 0
      %s392 = sadd.s32 %s391, 1
      %s393 = scalar_select %p390, %s391, %s392
      %p396 = pneg %p390
      %p397 = scmp.eq.s32.totalorder %s31, 3
      %p398 = por %p396, %p397
      %p399 = scmp.ne.s32.totalorder %s391, %s394
      %p400 = scmp.eq.s32.totalorder %s31, 0
      %p401 = por %p399, %p400
      %p402 = scmp.ne.s32.totalorder %s391, %s394
      %p403 = scmp.eq.s32.totalorder %s36, 3
      %p404 = por %p402, %p403
      %p405 = scmp.ne.s32.totalorder %s394, %s395
      %p406 = scmp.eq.s32.totalorder %s36, 0
      %p407 = por %p405, %p406
      %p408 = scmp.ne.s32.totalorder %s394, %s395
      %p409 = scmp.eq.s32.totalorder %s37, 3
      %p410 = por %p408, %p409
      %p412 = scmp.ne.s32.totalorder %s395, %s411
      %p413 = scmp.eq.s32.totalorder %s37, 0
      %p414 = por %p412, %p413
      %p415 = scmp.le.s32.totalorder 1, %s31
      %p416 = scmp.lt.s32.totalorder %s31, 5
      %p417 = pnand %p415, %p416
      %p418 = pneg %p417
      // Predicated region
      $region9: #{tpu_custom_call.1} parent=5 // pred_check
        _
      $region10: #{tpu_custom_call.1} parent=5 // pred_check_branch
        %420 = sbr.rel (%p417) target = $region12
      $region11: #{tpu_custom_call.1} parent=5 // pred_region
        %s421 = ssub.s32 %s31, 1
      $region12: #{tpu_custom_call.1} parent=5 // pred_fallthru
        _
      %p422 = scmp.lt.s32.totalorder %s31, 4
      // Predicated region
      $region13: #{tpu_custom_call.1} parent=5 // pred_check
        %p423 = pneg %p422
      $region14: #{tpu_custom_call.1} parent=5 // pred_check_branch
        %425 = sbr.rel (%p423) target = $region16
      $region15: #{tpu_custom_call.1} parent=5 // pred_region
        // Predicated region
        $region17: #{tpu_custom_call.1} parent=15 // pred_check
          %p426 = pneg %p63
        $region18: #{tpu_custom_call.1} parent=15 // pred_check_branch
          %428 = sbr.rel (%p426) target = $region20
        $region19: #{tpu_custom_call.1} parent=15 // pred_region
          %s429 = sand.u32 %s53, 1
          %s430 = scalar_lea.sflag [#allocation3], %s429
          %s431 = sand.u32 %s53, 1
          %s432 = smul.addr %s431, 8
          %s433 = scalar_lea.vmem [#allocation2], %s432
          %s435 = ssub.s32 128, 128
          %436 = vsyncadd %s430, %s435
          %s437 = smul.addr %s38, 128
          %s438 = scalar_lea.hbm %s0, %s437
          %s440 = sshll.u32 %s433, 4
          %s441 = int_to_ptr.vmem [resolvable:$true] %s440
          %443 = dma.hbm_to_vmem [thread:$0]  %s438, 128, %s441, %s430
        $region20: #{tpu_custom_call.1} parent=15 // pred_fallthru
          _
        // Predicated region
        $region21: #{tpu_custom_call.1} parent=15 // pred_check
          %p444 = pneg %p89
        $region22: #{tpu_custom_call.1} parent=15 // pred_check_branch
          %446 = sbr.rel (%p444) target = $region24
        $region23: #{tpu_custom_call.1} parent=15 // pred_region
          %p447 = scmp.lt.s32.totalorder %s39, 1
          %s448 = scalar_select %p447, %s39, 1
          %s449 = scalar_lea.vmem %s1, %s448
        $region24: #{tpu_custom_call.1} parent=15 // pred_fallthru
          _
        // Predicated region
        $region25: #{tpu_custom_call.1} parent=15 // pred_check
          %p450 = pneg %p115
        $region26: #{tpu_custom_call.1} parent=15 // pred_check_branch
          %452 = sbr.rel (%p450) target = $region28
        $region27: #{tpu_custom_call.1} parent=15 // pred_region
          %p453 = scmp.lt.s32.totalorder %s39, 1
          %s454 = scalar_select %p453, %s39, 1
          %s455 = scalar_lea.vmem %s2, %s454
        $region28: #{tpu_custom_call.1} parent=15 // pred_fallthru
          _
        // Predicated region
        $region29: #{tpu_custom_call.1} parent=15 // pred_check
          %p456 = pneg %p141
        $region30: #{tpu_custom_call.1} parent=15 // pred_check_branch
          %458 = sbr.rel (%p456) target = $region32
        $region31: #{tpu_custom_call.1} parent=15 // pred_region
          %p459 = scmp.lt.s32.totalorder %s39, 1
          %s460 = scalar_select %p459, %s39, 1
          %s461 = smul.addr %s460, 4
          %s462 = smul.addr %s461, 4
          %s463 = scalar_lea.vmem %s3, %s462
        $region32: #{tpu_custom_call.1} parent=15 // pred_fallthru
          _
        // Predicated region
        $region33: #{tpu_custom_call.1} parent=15 // pred_check
          %p464 = pneg %p167
        $region34: #{tpu_custom_call.1} parent=15 // pred_check_branch
          %466 = sbr.rel (%p464) target = $region36
        $region35: #{tpu_custom_call.1} parent=15 // pred_region
          %p467 = scmp.lt.s32.totalorder %s39, 1
          %s468 = scalar_select %p467, %s39, 1
          %s469 = scalar_lea.vmem %s4, %s468
        $region36: #{tpu_custom_call.1} parent=15 // pred_fallthru
          _
        // Predicated region
        $region37: #{tpu_custom_call.1} parent=15 // pred_check
          %p470 = pneg %p193
        $region38: #{tpu_custom_call.1} parent=15 // pred_check_branch
          %472 = sbr.rel (%p470) target = $region40
        $region39: #{tpu_custom_call.1} parent=15 // pred_region
          %p473 = scmp.lt.s32.totalorder %s39, 1
          %s474 = scalar_select %p473, %s39, 1
          %s475 = smul.addr %s474, 4
          %s476 = smul.addr %s475, 4
          %s477 = scalar_lea.vmem %s5, %s476
        $region40: #{tpu_custom_call.1} parent=15 // pred_fallthru
          _
        // Predicated region
        $region41: #{tpu_custom_call.1} parent=15 // pred_check
          %p478 = pneg %p219
        $region42: #{tpu_custom_call.1} parent=15 // pred_check_branch
          %480 = sbr.rel (%p478) target = $region44
        $region43: #{tpu_custom_call.1} parent=15 // pred_region
          %p481 = scmp.lt.s32.totalorder %s39, 1
          %s482 = scalar_select %p481, %s39, 1
          %s483 = scalar_lea.vmem %s6, %s482
        $region44: #{tpu_custom_call.1} parent=15 // pred_fallthru
          _
        // Predicated region
        $region45: #{tpu_custom_call.1} parent=15 // pred_check
          %p484 = pneg %p245
        $region46: #{tpu_custom_call.1} parent=15 // pred_check_branch
          %486 = sbr.rel (%p484) target = $region48
        $region47: #{tpu_custom_call.1} parent=15 // pred_region
          %s487 = sand.u32 %s31, 1
          %s488 = scalar_lea.sflag [#allocation6], %s487
          %s489 = sand.u32 %s235, 1
          %s490 = scalar_lea.vmem [#allocation5], %s489
          %s492 = ssub.s32 16, 16
          %493 = vsyncadd %s488, %s492
          %s494 = smul.addr %s39, 16
          %s495 = scalar_lea.hbm %s7, %s494
          %s497 = sshll.u32 %s490, 4
          %s498 = int_to_ptr.vmem [resolvable:$true] %s497
          %500 = dma.hbm_to_vmem [thread:$0]  %s495, 16, %s498, %s488
        $region48: #{tpu_custom_call.1} parent=15 // pred_fallthru
          _
        // Predicated region
        $region49: #{tpu_custom_call.1} parent=15 // pred_check
          %p501 = pneg %p271
        $region50: #{tpu_custom_call.1} parent=15 // pred_check_branch
          %503 = sbr.rel (%p501) target = $region52
        $region51: #{tpu_custom_call.1} parent=15 // pred_region
          %s504 = sand.u32 %s31, 1
          %s505 = scalar_lea.sflag [#allocation6], %s504
          %s506 = sand.u32 %s261, 1
          %s507 = scalar_lea.vmem [#allocation7], %s506
          %s509 = ssub.s32 16, 16
          %510 = vsyncadd %s505, %s509
          %s511 = smul.addr %s39, 16
          %s512 = scalar_lea.hbm %s8, %s511
          %s514 = sshll.u32 %s507, 4
          %s515 = int_to_ptr.vmem [resolvable:$true] %s514
          %517 = dma.hbm_to_vmem [thread:$0]  %s512, 16, %s515, %s505
        $region52: #{tpu_custom_call.1} parent=15 // pred_fallthru
          _
        // Predicated region
        $region53: #{tpu_custom_call.1} parent=15 // pred_check
          %p518 = pneg %p297
        $region54: #{tpu_custom_call.1} parent=15 // pred_check_branch
          %520 = sbr.rel (%p518) target = $region56
        $region55: #{tpu_custom_call.1} parent=15 // pred_region
          %p521 = scmp.lt.s32.totalorder %s39, 1
          %s522 = scalar_select %p521, %s39, 1
          %s523 = smul.addr %s522, 4
          %s524 = smul.addr %s523, 4
          %s525 = scalar_lea.vmem %s9, %s524
        $region56: #{tpu_custom_call.1} parent=15 // pred_fallthru
          _
        // Predicated region
        $region57: #{tpu_custom_call.1} parent=15 // pred_check
          %p526 = pneg %p323
        $region58: #{tpu_custom_call.1} parent=15 // pred_check_branch
          %528 = sbr.rel (%p526) target = $region60
        $region59: #{tpu_custom_call.1} parent=15 // pred_region
          %s529 = sand.u32 %s313, 1
          %s530 = scalar_lea.sflag [#allocation9], %s529
          %s531 = sand.u32 %s313, 1
          %s532 = scalar_lea.vmem [#allocation8], %s531
          %s534 = ssub.s32 16, 16
          %535 = vsyncadd %s530, %s534
          %s536 = smul.addr %s39, 16
          %s537 = scalar_lea.hbm %s10, %s536
          %s539 = sshll.u32 %s532, 4
          %s540 = int_to_ptr.vmem [resolvable:$true] %s539
          %542 = dma.hbm_to_vmem [thread:$0]  %s537, 16, %s540, %s530
        $region60: #{tpu_custom_call.1} parent=15 // pred_fallthru
          _
        // Predicated region
        $region61: #{tpu_custom_call.1} parent=15 // pred_check
          %p543 = pneg %p349
        $region62: #{tpu_custom_call.1} parent=15 // pred_check_branch
          %545 = sbr.rel (%p543) target = $region64
        $region63: #{tpu_custom_call.1} parent=15 // pred_region
          %p546 = scmp.lt.s32.totalorder %s39, 1
          %s547 = scalar_select %p546, %s39, 1
          %s548 = smul.addr %s547, 8
          %s549 = smul.addr %s548, 4
          %s550 = scalar_lea.vmem %s11, %s549
        $region64: #{tpu_custom_call.1} parent=15 // pred_fallthru
          _
        // Predicated region
        $region65: #{tpu_custom_call.1} parent=15 // pred_check
          %p551 = pneg %p375
        $region66: #{tpu_custom_call.1} parent=15 // pred_check_branch
          %553 = sbr.rel (%p551) target = $region68
        $region67: #{tpu_custom_call.1} parent=15 // pred_region
          %p554 = scmp.lt.s32.totalorder %s39, 1
          %s555 = scalar_select %p554, %s39, 1
          %s556 = scalar_lea.vmem %s12, %s555
        $region68: #{tpu_custom_call.1} parent=15 // pred_fallthru
          _
      $region16: #{tpu_custom_call.1} parent=5 // pred_fallthru
        _
      %p557 = scmp.le.s32.totalorder 1, %s31
      %p558 = scmp.lt.s32.totalorder %s31, 5
      %p559 = pnand %p557, %p558
      %p560 = pneg %p559
      // Predicated region
      $region69: #{tpu_custom_call.1} parent=5 // pred_check
        _
      $region70: #{tpu_custom_call.1} parent=5 // pred_check_branch
        %562 = sbr.rel (%p559) target = $region72
      $region71: #{tpu_custom_call.1} parent=5 // pred_region
        %s563 = ssub.s32 %s31, 1
        %s564 = sand.u32 %s56, 1
        %s565 = scalar_lea.sflag [#allocation3], %s564
        %s566 = sand.u32 %s56, 1
        %s567 = smul.addr %s566, 8
        %s568 = scalar_lea.vmem [#allocation2], %s567
        // Predicated region
        $region73: #{tpu_custom_call.1} parent=71 // pred_check
          %p569 = pneg %p69
        $region74: #{tpu_custom_call.1} parent=71 // pred_check_branch
          %571 = sbr.rel (%p569) target = $region76
        $region75: #{tpu_custom_call.1} parent=71 // pred_region
          %572 = dma.done %s565, 128
        $region76: #{tpu_custom_call.1} parent=71 // pred_fallthru
          _
        %s573 = sand.u32 %s36, 1
        %s574 = scalar_lea.sflag [#allocation6], %s573
        %s575 = sand.u32 %s238, 1
        %s576 = scalar_lea.vmem [#allocation5], %s575
        // Predicated region
        $region77: #{tpu_custom_call.1} parent=71 // pred_check
          %p577 = pneg %p251
        $region78: #{tpu_custom_call.1} parent=71 // pred_check_branch
          %579 = sbr.rel (%p577) target = $region80
        $region79: #{tpu_custom_call.1} parent=71 // pred_region
          %580 = dma.done %s574, 16
        $region80: #{tpu_custom_call.1} parent=71 // pred_fallthru
          _
        %s581 = sand.u32 %s36, 1
        %s582 = scalar_lea.sflag [#allocation6], %s581
        %s583 = sand.u32 %s264, 1
        %s584 = scalar_lea.vmem [#allocation7], %s583
        // Predicated region
        $region81: #{tpu_custom_call.1} parent=71 // pred_check
          %p585 = pneg %p277
        $region82: #{tpu_custom_call.1} parent=71 // pred_check_branch
          %587 = sbr.rel (%p585) target = $region84
        $region83: #{tpu_custom_call.1} parent=71 // pred_region
          %588 = dma.done %s582, 16
        $region84: #{tpu_custom_call.1} parent=71 // pred_fallthru
          _
        %s589 = sand.u32 %s316, 1
        %s590 = scalar_lea.sflag [#allocation9], %s589
        %s591 = sand.u32 %s316, 1
        %s592 = scalar_lea.vmem [#allocation8], %s591
        // Predicated region
        $region85: #{tpu_custom_call.1} parent=71 // pred_check
          %p593 = pneg %p329
        $region86: #{tpu_custom_call.1} parent=71 // pred_check_branch
          %595 = sbr.rel (%p593) target = $region88
        $region87: #{tpu_custom_call.1} parent=71 // pred_region
          %596 = dma.done %s590, 16
        $region88: #{tpu_custom_call.1} parent=71 // pred_fallthru
          _
        %s597 = sand.u32 %s56, 1
        %s598 = scalar_lea.sflag [#allocation3], %s597
        %s599 = sand.u32 %s56, 1
        %s600 = smul.addr %s599, 8
        %s601 = scalar_lea.vmem [#allocation2], %s600
        %p602 = pneg %p69
        %p603 = pneg %p66
        %p604 = scmp.lt.s32.totalorder %s41, 1
        %s605 = scalar_select %p604, %s41, 1
        %s606 = scalar_lea.vmem %s1, %s605
        %p607 = pneg %p95
        %p608 = pneg %p92
        %p609 = scmp.lt.s32.totalorder %s41, 1
        %s610 = scalar_select %p609, %s41, 1
        %s611 = scalar_lea.vmem %s2, %s610
        %p612 = pneg %p121
        %p613 = pneg %p118
        %p614 = scmp.lt.s32.totalorder %s41, 1
        %s615 = scalar_select %p614, %s41, 1
        %s616 = smul.addr %s615, 4
        %s617 = smul.addr %s616, 4
        %s618 = scalar_lea.vmem %s3, %s617
        %p619 = pneg %p147
        %p620 = pneg %p144
        %p621 = scmp.lt.s32.totalorder %s41, 1
        %s622 = scalar_select %p621, %s41, 1
        %s623 = scalar_lea.vmem %s4, %s622
        %p624 = pneg %p173
        %p625 = pneg %p170
        %p626 = scmp.lt.s32.totalorder %s41, 1
        %s627 = scalar_select %p626, %s41, 1
        %s628 = smul.addr %s627, 4
        %s629 = smul.addr %s628, 4
        %s630 = scalar_lea.vmem %s5, %s629
        %p631 = pneg %p199
        %p632 = pneg %p196
        %p633 = scmp.lt.s32.totalorder %s41, 1
        %s634 = scalar_select %p633, %s41, 1
        %s635 = scalar_lea.vmem %s6, %s634
        %p636 = pneg %p225
        %p637 = pneg %p222
        %s638 = sand.u32 %s36, 1
        %s639 = scalar_lea.sflag [#allocation6], %s638
        %s640 = sand.u32 %s238, 1
        %s641 = scalar_lea.vmem [#allocation5], %s640
        %p642 = pneg %p251
        %p643 = pneg %p248
        %s644 = sand.u32 %s36, 1
        %s645 = scalar_lea.sflag [#allocation6], %s644
        %s646 = sand.u32 %s264, 1
        %s647 = scalar_lea.vmem [#allocation7], %s646
        %p648 = pneg %p277
        %p649 = pneg %p274
        %p650 = scmp.lt.s32.totalorder %s41, 1
        %s651 = scalar_select %p650, %s41, 1
        %s652 = smul.addr %s651, 4
        %s653 = smul.addr %s652, 4
        %s654 = scalar_lea.vmem %s9, %s653
        %p655 = pneg %p303
        %p656 = pneg %p300
        %s657 = sand.u32 %s316, 1
        %s658 = scalar_lea.sflag [#allocation9], %s657
        %s659 = sand.u32 %s316, 1
        %s660 = scalar_lea.vmem [#allocation8], %s659
        %p661 = pneg %p329
        %p662 = pneg %p326
        %p663 = scmp.lt.s32.totalorder %s41, 1
        %s664 = scalar_select %p663, %s41, 1
        %s665 = smul.addr %s664, 8
        %s666 = smul.addr %s665, 4
        %s667 = scalar_lea.vmem %s11, %s666
        %p668 = pneg %p355
        %p669 = pneg %p352
        %p670 = scmp.lt.s32.totalorder %s41, 1
        %s671 = scalar_select %p670, %s41, 1
        %s672 = scalar_lea.vmem %s12, %s671
        %p673 = pneg %p381
        %p674 = pneg %p378
        %p675 = pneg %p407
        %p676 = pneg %p404
        %s677 = sand.u32 %s394, 1
        %s678 = scalar_lea.sflag [#allocation4], %s677
        %s679 = sand.u32 %s394, 1
        %s680 = smul.addr %s679, 8
        %s681 = scalar_lea.vmem [#allocation10], %s680
        %p682 = scmp.lt.s32.totalorder %s41, 1
        %s683 = scalar_select %p682, %s41, 1
        %s684 = scalar_lea.vmem %s1, %s683
        %p685 = scmp.lt.s32.totalorder %s41, 1
        %s686 = scalar_select %p685, %s41, 1
        %s687 = scalar_lea.vmem %s2, %s686
        %p688 = scmp.lt.s32.totalorder %s41, 1
        %s689 = scalar_select %p688, %s41, 1
        %s690 = smul.addr %s689, 4
        %s691 = smul.addr %s690, 4
        %s692 = scalar_lea.vmem %s3, %s691
        %p693 = scmp.lt.s32.totalorder %s41, 1
        %s694 = scalar_select %p693, %s41, 1
        %s695 = scalar_lea.vmem %s4, %s694
        %p696 = scmp.lt.s32.totalorder %s41, 1
        %s697 = scalar_select %p696, %s41, 1
        %s698 = smul.addr %s697, 4
        %s699 = smul.addr %s698, 4
        %s700 = scalar_lea.vmem %s5, %s699
        %p701 = scmp.lt.s32.totalorder %s41, 1
        %s702 = scalar_select %p701, %s41, 1
        %s703 = scalar_lea.vmem %s6, %s702
        %p704 = scmp.lt.s32.totalorder %s41, 1
        %s705 = scalar_select %p704, %s41, 1
        %s706 = smul.addr %s705, 4
        %s707 = smul.addr %s706, 4
        %s708 = scalar_lea.vmem %s9, %s707
        %p709 = scmp.lt.s32.totalorder %s41, 1
        %s710 = scalar_select %p709, %s41, 1
        %s711 = smul.addr %s710, 8
        %s712 = smul.addr %s711, 4
        %s713 = scalar_lea.vmem %s11, %s712
        %p714 = scmp.lt.s32.totalorder %s41, 1
        %s715 = scalar_select %p714, %s41, 1
        %s716 = scalar_lea.vmem %s12, %s715
        %p718 = scmp.eq.s32.totalorder %s41, 0
        // Predicated region
        $region89: #{tpu_custom_call.1} parent=71 // pred_check
          %p719 = pneg %p718
        $region90: #{tpu_custom_call.1} parent=71 // pred_check_branch
          %721 = sbr.rel (%p719) target = $region92
        $region91: #{tpu_custom_call.1} parent=71 // pred_region
          %v722 = vld [vmem:[%s568] sm:$0xff]
          %vm723 = vcmask 261120
          %724 = vst.msk [vmem:[%s681] sm:$0xff] %vm723, %v722
        $region92: #{tpu_custom_call.1} parent=71 // pred_fallthru
          _
        %v725 = vld [vmem:[%s681] sm:$0xff]
        %v726 = vld [vmem:[%s684] sm:$0x1]
        %v727 = vld [vmem:[%s687] sm:$0x1]
        %v728 = vld [vmem:[%s576] sm:$0x1]
        %v729 = vld [vmem:[%s584] sm:$0x1]
        %v730 = vld [vmem:[%s692] sm:$0xf]
        %v731 = vld [vmem:[%s692 + $0x4] sm:$0xf]
        %v732 = vld [vmem:[%s692 + $0x8] sm:$0xf]
        %v733 = vld [vmem:[%s692 + $0xc] sm:$0xf]
        %v734 = vld [vmem:[%s695] sm:$0x1]
        %v735 = vld [vmem:[%s700] sm:$0xf]
        %v736 = vld [vmem:[%s700 + $0x4] sm:$0xf]
        %v737 = vld [vmem:[%s700 + $0x8] sm:$0xf]
        %v738 = vld [vmem:[%s700 + $0xc] sm:$0xf]
        %v739 = vld [vmem:[%s703] sm:$0x1]
        %v740 = vld [vmem:[%s708] sm:$0xf]
        %v741 = vld [vmem:[%s708 + $0x4] sm:$0xf]
        %v742 = vld [vmem:[%s708 + $0x8] sm:$0xf]
        %v743 = vld [vmem:[%s708 + $0xc] sm:$0xf]
        %v744 = vld [vmem:[%s592] sm:$0x1]
        %v745 = vld [vmem:[%s713] sm:$0xf]
        %v746 = vld [vmem:[%s713 + $0x4] sm:$0xf]
        %v747 = vld [vmem:[%s713 + $0x8] sm:$0xf]
        %v748 = vld [vmem:[%s713 + $0xc] sm:$0xf]
        %v749 = vld [vmem:[%s713 + $0x10] sm:$0xf]
        %v750 = vld [vmem:[%s713 + $0x14] sm:$0xf]
        %v751 = vld [vmem:[%s713 + $0x18] sm:$0xf]
        %v752 = vld [vmem:[%s713 + $0x1c] sm:$0xf]
        %v753 = vld [vmem:[%s716] sm:$0x1]
        %vm754 = vcmask 261120
        %v755 = vsel %vm754, %v725, 0.0
        %756 = vadd.xlane.f32.xlu0 %v755
        %v757 = vpop.xlane.xlu0 %756
        %v758 = vrcp.pop 32.0
        %v759 = vmul.f32 %v757, %v758
        %v760 = vsub.f32 %v725, %v759
        %v761 = vmul.f32 %v760, %v760
        %v762 = vsel %vm754, %v761, 0.0
        %763 = vadd.xlane.f32.xlu0 %v762
        %v764 = vpop.xlane.xlu0 %763
        %v765 = vmul.f32 %v764, %v758
        %v766 = vadd.f32 %v765, 1e-05
        %v767 = vrsqrt.pop %v766
        %v768 = vmul.f32 %v760, %v767
        %v770 = vlaneseq
        %v771 = vshrl.u32 %v770, 7
        %v772 = vsub.s32 0, %v771
        %v773 = vrot.slane %v726, %v772
        %v775 = vmul.f32 %v768, %v773
        %v777 = vlaneseq
        %v778 = vshrl.u32 %v777, 7
        %v779 = vsub.s32 0, %v778
        %v780 = vrot.slane %v727, %v779
        %v782 = vadd.f32 %v775, %v780
        %v783 = vpack.c.bf16 %v782, %v782
        %v785 = vlaneseq
        %v786 = vshrl.u32 %v785, 7
        %v787 = vsub.s32 0, %v786
        %v788 = vrot.slane %v734, %v787
        %v794 = vunpack.c.l.b16 %v730
        %v795 = vunpack.c.l.b16 %v731
        %v796 = vunpack.c.l.b16 %v732
        %v797 = vunpack.c.l.b16 %v733
        %v798 = vpack.c.b16 %v795, %v794
        %v799 = vpack.c.b16 %v797, %v796
        %v803 = vsel %vm754, %v783, 0
        %805 = vmatprep.subr.bf16.mxu0 0
        %806 = vmatpush1.bf16.msra.mxu0 %v798
        %807 = vmatprep.subr.bf16.mxu0 0
        %808 = vmatpush1.bf16.msra.mxu0 %v799
        %809 = vmatprep.subr.bf16.mxu0 0
        %810 = vmatpush1.bf16.msra.mxu0 0
        %811 = vmatprep.subr.bf16.mxu0 0
        %812 = vmatpush1.bf16.msra.mxu0 0
        %813 = vmatprep.subr.bf16.mxu0 0
        %814 = vmatpush1.bf16.msra.mxu0 0
        %815 = vmatprep.subr.bf16.mxu0 0
        %816 = vmatpush1.bf16.msra.mxu0 0
        %817 = vmatprep.subr.bf16.mxu0 0
        %818 = vmatpush1.bf16.msra.mxu0 0
        %819 = vmatprep.subr.bf16.mxu0 0
        %820 = vmatpush1.bf16.msra.mxu0 0
        %821 = vmatprep.subr.bf16.mxu0 0
        %822 = vmatpush1.bf16.msra.mxu0 0
        %823 = vmatprep.subr.bf16.mxu0 0
        %824 = vmatpush1.bf16.msra.mxu0 0
        %825 = vmatprep.subr.bf16.mxu0 0
        %826 = vmatpush1.bf16.msra.mxu0 0
        %827 = vmatprep.subr.bf16.mxu0 0
        %828 = vmatpush1.bf16.msra.mxu0 0
        %829 = vmatprep.subr.bf16.mxu0 0
        %830 = vmatpush1.bf16.msra.mxu0 0
        %831 = vmatprep.subr.bf16.mxu0 0
        %832 = vmatpush1.bf16.msra.mxu0 0
        %833 = vmatprep.subr.bf16.mxu0 0
        %834 = vmatpush1.bf16.msra.mxu0 0
        %835 = vmatprep.subr.bf16.mxu0 0
        %836 = vmatpush1.bf16.msra.mxu0 0
        %837 = vmatprep.mubr.bf16.mxu0 0
        %838 = vmatmul.mubr.bf16.gmra.mrb[0].mxu0 %v803
        %v839 = vpop.f32.mrb[0].mxu0
        %v840 = vadd.f32 %v788, %v839
        %v841 = vpop.f32.mrb[0].mxu0
        %v842 = vpop.f32.mrb[0].mxu0
        %v843 = vpop.f32.mrb[0].mxu0
        %844 = vdwg.mxu0
        %846 = vrot.lane.b32.xlu0 %v840, 120
        %v847 = vpop.permute.xlu0 %846
        %849 = vrot.lane.b32.xlu0 %v840, 112
        %v850 = vpop.permute.xlu0 %849
        %852 = vrot.lane.b32.xlu0 %v840, 104
        %v853 = vpop.permute.xlu0 %852
        %v855 = vpack.c.bf16 %v840, %v840
        %v856 = vpack.c.bf16 %v847, %v847
        %v857 = vpack.c.bf16 %v850, %v850
        %v858 = vpack.c.bf16 %v853, %v853
        %860 = vrot.lane.b32.xlu0 %v855, 96
        %v861 = vpop.permute.xlu0 %860
        %vm862 = vcmask 64512
        %v864 = vsel %vm862, %v855, 0
        %v867 = vsel %vm862, %v861, 0
        %869 = vmatprep.subr.bf16.mxu0 0
        %870 = vmatpush1.bf16.xpose.msra.mxu0 %v867
        %871 = vmatprep.subr.bf16.mxu0 0
        %872 = vmatpush1.bf16.xpose.msra.mxu0 0
        %873 = vmatprep.subr.bf16.mxu0 0
        %874 = vmatpush1.bf16.xpose.msra.mxu0 0
        %875 = vmatprep.subr.bf16.mxu0 0
        %876 = vmatpush1.bf16.xpose.msra.mxu0 0
        %877 = vmatprep.subr.bf16.mxu0 0
        %878 = vmatpush1.bf16.xpose.msra.mxu0 0
        %879 = vmatprep.subr.bf16.mxu0 0
        %880 = vmatpush1.bf16.xpose.msra.mxu0 0
        %881 = vmatprep.subr.bf16.mxu0 0
        %882 = vmatpush1.bf16.xpose.msra.mxu0 0
        %883 = vmatprep.subr.bf16.mxu0 0
        %884 = vmatpush1.bf16.xpose.msra.mxu0 0
        %885 = vmatprep.subr.bf16.mxu0 0
        %886 = vmatpush1.bf16.xpose.msra.mxu0 0
        %887 = vmatprep.subr.bf16.mxu0 0
        %888 = vmatpush1.bf16.xpose.msra.mxu0 0
        %889 = vmatprep.subr.bf16.mxu0 0
        %890 = vmatpush1.bf16.xpose.msra.mxu0 0
        %891 = vmatprep.subr.bf16.mxu0 0
        %892 = vmatpush1.bf16.xpose.msra.mxu0 0
        %893 = vmatprep.subr.bf16.mxu0 0
        %894 = vmatpush1.bf16.xpose.msra.mxu0 0
        %895 = vmatprep.subr.bf16.mxu0 0
        %896 = vmatpush1.bf16.xpose.msra.mxu0 0
        %897 = vmatprep.subr.bf16.mxu0 0
        %898 = vmatpush1.bf16.xpose.msra.mxu0 0
        %899 = vmatprep.subr.bf16.mxu0 0
        %900 = vmatpush1.bf16.xpose.msra.mxu0 0
        %901 = vmatprep.mubr.bf16.mxu0 0
        %902 = vmatmul.mubr.bf16.gmra.mrb[0].mxu0 %v864
        %v903 = vpop.f32.mrb[0].mxu0
        %v904 = vadd.f32 0.0, %v903
        %v905 = vpop.f32.mrb[0].mxu0
        %v906 = vpop.f32.mrb[0].mxu0
        %v907 = vpop.f32.mrb[0].mxu0
        %908 = vdwg.mxu0
        %910 = vrot.lane.b32.xlu0 %v856, 96
        %v911 = vpop.permute.xlu0 %910
        %v913 = vsel %vm862, %v856, 0
        %v916 = vsel %vm862, %v911, 0
        %918 = vmatprep.subr.bf16.mxu0 0
        %919 = vmatpush1.bf16.xpose.msra.mxu0 %v916
        %920 = vmatprep.subr.bf16.mxu0 0
        %921 = vmatpush1.bf16.xpose.msra.mxu0 0
        %922 = vmatprep.subr.bf16.mxu0 0
        %923 = vmatpush1.bf16.xpose.msra.mxu0 0
        %924 = vmatprep.subr.bf16.mxu0 0
        %925 = vmatpush1.bf16.xpose.msra.mxu0 0
        %926 = vmatprep.subr.bf16.mxu0 0
        %927 = vmatpush1.bf16.xpose.msra.mxu0 0
        %928 = vmatprep.subr.bf16.mxu0 0
        %929 = vmatpush1.bf16.xpose.msra.mxu0 0
        %930 = vmatprep.subr.bf16.mxu0 0
        %931 = vmatpush1.bf16.xpose.msra.mxu0 0
        %932 = vmatprep.subr.bf16.mxu0 0
        %933 = vmatpush1.bf16.xpose.msra.mxu0 0
        %934 = vmatprep.subr.bf16.mxu0 0
        %935 = vmatpush1.bf16.xpose.msra.mxu0 0
        %936 = vmatprep.subr.bf16.mxu0 0
        %937 = vmatpush1.bf16.xpose.msra.mxu0 0
        %938 = vmatprep.subr.bf16.mxu0 0
        %939 = vmatpush1.bf16.xpose.msra.mxu0 0
        %940 = vmatprep.subr.bf16.mxu0 0
        %941 = vmatpush1.bf16.xpose.msra.mxu0 0
        %942 = vmatprep.subr.bf16.mxu0 0
        %943 = vmatpush1.bf16.xpose.msra.mxu0 0
        %944 = vmatprep.subr.bf16.mxu0 0
        %945 = vmatpush1.bf16.xpose.msra.mxu0 0
        %946 = vmatprep.subr.bf16.mxu0 0
        %947 = vmatpush1.bf16.xpose.msra.mxu0 0
        %948 = vmatprep.subr.bf16.mxu0 0
        %949 = vmatpush1.bf16.xpose.msra.mxu0 0
        %950 = vmatprep.mubr.bf16.mxu0 0
        %951 = vmatmul.mubr.bf16.gmra.mrb[0].mxu0 %v913
        %v952 = vpop.f32.mrb[0].mxu0
        %v953 = vadd.f32 0.0, %v952
        %v954 = vpop.f32.mrb[0].mxu0
        %v955 = vpop.f32.mrb[0].mxu0
        %v956 = vpop.f32.mrb[0].mxu0
        %957 = vdwg.mxu0
        %959 = vrot.lane.b32.xlu0 %v857, 96
        %v960 = vpop.permute.xlu0 %959
        %v962 = vsel %vm862, %v857, 0
        %v965 = vsel %vm862, %v960, 0
        %967 = vmatprep.subr.bf16.mxu0 0
        %968 = vmatpush1.bf16.xpose.msra.mxu0 %v965
        %969 = vmatprep.subr.bf16.mxu0 0
        %970 = vmatpush1.bf16.xpose.msra.mxu0 0
        %971 = vmatprep.subr.bf16.mxu0 0
        %972 = vmatpush1.bf16.xpose.msra.mxu0 0
        %973 = vmatprep.subr.bf16.mxu0 0
        %974 = vmatpush1.bf16.xpose.msra.mxu0 0
        %975 = vmatprep.subr.bf16.mxu0 0
        %976 = vmatpush1.bf16.xpose.msra.mxu0 0
        %977 = vmatprep.subr.bf16.mxu0 0
        %978 = vmatpush1.bf16.xpose.msra.mxu0 0
        %979 = vmatprep.subr.bf16.mxu0 0
        %980 = vmatpush1.bf16.xpose.msra.mxu0 0
        %981 = vmatprep.subr.bf16.mxu0 0
        %982 = vmatpush1.bf16.xpose.msra.mxu0 0
        %983 = vmatprep.subr.bf16.mxu0 0
        %984 = vmatpush1.bf16.xpose.msra.mxu0 0
        %985 = vmatprep.subr.bf16.mxu0 0
        %986 = vmatpush1.bf16.xpose.msra.mxu0 0
        %987 = vmatprep.subr.bf16.mxu0 0
        %988 = vmatpush1.bf16.xpose.msra.mxu0 0
        %989 = vmatprep.subr.bf16.mxu0 0
        %990 = vmatpush1.bf16.xpose.msra.mxu0 0
        %991 = vmatprep.subr.bf16.mxu0 0
        %992 = vmatpush1.bf16.xpose.msra.mxu0 0
        %993 = vmatprep.subr.bf16.mxu0 0
        %994 = vmatpush1.bf16.xpose.msra.mxu0 0
        %995 = vmatprep.subr.bf16.mxu0 0
        %996 = vmatpush1.bf16.xpose.msra.mxu0 0
        %997 = vmatprep.subr.bf16.mxu0 0
        %998 = vmatpush1.bf16.xpose.msra.mxu0 0
        %999 = vmatprep.mubr.bf16.mxu0 0
        %1000 = vmatmul.mubr.bf16.gmra.mrb[0].mxu0 %v962
        %v1001 = vpop.f32.mrb[0].mxu0
        %v1002 = vadd.f32 0.0, %v1001
        %v1003 = vpop.f32.mrb[0].mxu0
        %v1004 = vpop.f32.mrb[0].mxu0
        %v1005 = vpop.f32.mrb[0].mxu0
        %1006 = vdwg.mxu0
        %1008 = vrot.lane.b32.xlu0 %v858, 96
        %v1009 = vpop.permute.xlu0 %1008
        %v1011 = vsel %vm862, %v858, 0
        %v1014 = vsel %vm862, %v1009, 0
        %1016 = vmatprep.subr.bf16.mxu0 0
        %1017 = vmatpush1.bf16.xpose.msra.mxu0 %v1014
        %1018 = vmatprep.subr.bf16.mxu0 0
        %1019 = vmatpush1.bf16.xpose.msra.mxu0 0
        %1020 = vmatprep.subr.bf16.mxu0 0
        %1021 = vmatpush1.bf16.xpose.msra.mxu0 0
        %1022 = vmatprep.subr.bf16.mxu0 0
        %1023 = vmatpush1.bf16.xpose.msra.mxu0 0
        %1024 = vmatprep.subr.bf16.mxu0 0
        %1025 = vmatpush1.bf16.xpose.msra.mxu0 0
        %1026 = vmatprep.subr.bf16.mxu0 0
        %1027 = vmatpush1.bf16.xpose.msra.mxu0 0
        %1028 = vmatprep.subr.bf16.mxu0 0
        %1029 = vmatpush1.bf16.xpose.msra.mxu0 0
        %1030 = vmatprep.subr.bf16.mxu0 0
        %1031 = vmatpush1.bf16.xpose.msra.mxu0 0
        %1032 = vmatprep.subr.bf16.mxu0 0
        %1033 = vmatpush1.bf16.xpose.msra.mxu0 0
        %1034 = vmatprep.subr.bf16.mxu0 0
        %1035 = vmatpush1.bf16.xpose.msra.mxu0 0
        %1036 = vmatprep.subr.bf16.mxu0 0
        %1037 = vmatpush1.bf16.xpose.msra.mxu0 0
        %1038 = vmatprep.subr.bf16.mxu0 0
        %1039 = vmatpush1.bf16.xpose.msra.mxu0 0
        %1040 = vmatprep.subr.bf16.mxu0 0
        %1041 = vmatpush1.bf16.xpose.msra.mxu0 0
        %1042 = vmatprep.subr.bf16.mxu0 0
        %1043 = vmatpush1.bf16.xpose.msra.mxu0 0
        %1044 = vmatprep.subr.bf16.mxu0 0
        %1045 = vmatpush1.bf16.xpose.msra.mxu0 0
        %1046 = vmatprep.subr.bf16.mxu0 0
        %1047 = vmatpush1.bf16.xpose.msra.mxu0 0
        %1048 = vmatprep.mubr.bf16.mxu0 0
        %1049 = vmatmul.mubr.bf16.gmra.mrb[0].mxu0 %v1011
        %v1050 = vpop.f32.mrb[0].mxu0
        %v1051 = vadd.f32 0.0, %v1050
        %v1052 = vpop.f32.mrb[0].mxu0
        %v1053 = vpop.f32.mrb[0].mxu0
        %v1054 = vpop.f32.mrb[0].mxu0
        %1055 = vdwg.mxu0
        %v1056 = vsel %vm862, %v904, -inf
        %1057 = vmax.xlane.f32.xlu0 %v1056
        %v1058 = vpop.xlane.xlu0 %1057
        %v1059 = vsel %vm862, %v953, -inf
        %1060 = vmax.xlane.f32.xlu0 %v1059
        %v1061 = vpop.xlane.xlu0 %1060
        %v1062 = vsel %vm862, %v1002, -inf
        %1063 = vmax.xlane.f32.xlu0 %v1062
        %v1064 = vpop.xlane.xlu0 %1063
        %v1065 = vsel %vm862, %v1051, -inf
        %1066 = vmax.xlane.f32.xlu0 %v1065
        %v1067 = vpop.xlane.xlu0 %1066
        %v1068 = vsub.f32 %v904, %v1058
        %v1069 = vsub.f32 %v953, %v1061
        %v1070 = vsub.f32 %v1002, %v1064
        %v1071 = vsub.f32 %v1051, %v1067
        %v1072 = vmul.f32 %v1068, 1.442695
        %v1073 = vpow.pop %v1072
        %v1074 = vmul.f32 %v1069, 1.442695
        %v1075 = vpow.pop %v1074
        %v1076 = vmul.f32 %v1070, 1.442695
        %v1077 = vpow.pop %v1076
        %v1078 = vmul.f32 %v1071, 1.442695
        %v1079 = vpow.pop %v1078
        %v1080 = vsel %vm862, %v1073, 0.0
        %1081 = vadd.xlane.f32.xlu0 %v1080
        %v1082 = vpop.xlane.xlu0 %1081
        %v1083 = vsel %vm862, %v1075, 0.0
        %1084 = vadd.xlane.f32.xlu0 %v1083
        %v1085 = vpop.xlane.xlu0 %1084
        %v1086 = vsel %vm862, %v1077, 0.0
        %1087 = vadd.xlane.f32.xlu0 %v1086
        %v1088 = vpop.xlane.xlu0 %1087
        %v1089 = vsel %vm862, %v1079, 0.0
        %1090 = vadd.xlane.f32.xlu0 %v1089
        %v1091 = vpop.xlane.xlu0 %1090
        %v1092 = vrcp.pop %v1082
        %v1093 = vrcp.pop %v1085
        %v1094 = vrcp.pop %v1088
        %v1095 = vrcp.pop %v1091
        %v1096 = vmul.f32 %v1073, %v1092
        %v1097 = vmul.f32 %v1075, %v1093
        %v1098 = vmul.f32 %v1077, %v1094
        %v1099 = vmul.f32 %v1079, %v1095
        %v1100 = vpack.c.bf16 %v1096, %v1096
        %v1101 = vpack.c.bf16 %v1097, %v1097
        %v1102 = vpack.c.bf16 %v1098, %v1098
        %v1103 = vpack.c.bf16 %v1099, %v1099
        %1104 = vrot.lane.b32.xlu0 %v855, 64
        %v1105 = vpop.permute.xlu0 %1104
        %v1107 = vsel %vm862, %v1100, 0
        %vm1109 = vcmask 1043456
        %v1111 = vsel %vm1109, %v1105, 0
        %1113 = vmatprep.subr.bf16.mxu0 0
        %1114 = vmatpush1.bf16.msra.mxu0 %v1111
        %1115 = vmatprep.subr.bf16.mxu0 0
        %1116 = vmatpush1.bf16.msra.mxu0 0
        %1117 = vmatprep.subr.bf16.mxu0 0
        %1118 = vmatpush1.bf16.msra.mxu0 0
        %1119 = vmatprep.subr.bf16.mxu0 0
        %1120 = vmatpush1.bf16.msra.mxu0 0
        %1121 = vmatprep.subr.bf16.mxu0 0
        %1122 = vmatpush1.bf16.msra.mxu0 0
        %1123 = vmatprep.subr.bf16.mxu0 0
        %1124 = vmatpush1.bf16.msra.mxu0 0
        %1125 = vmatprep.subr.bf16.mxu0 0
        %1126 = vmatpush1.bf16.msra.mxu0 0
        %1127 = vmatprep.subr.bf16.mxu0 0
        %1128 = vmatpush1.bf16.msra.mxu0 0
        %1129 = vmatprep.subr.bf16.mxu0 0
        %1130 = vmatpush1.bf16.msra.mxu0 0
        %1131 = vmatprep.subr.bf16.mxu0 0
        %1132 = vmatpush1.bf16.msra.mxu0 0
        %1133 = vmatprep.subr.bf16.mxu0 0
        %1134 = vmatpush1.bf16.msra.mxu0 0
        %1135 = vmatprep.subr.bf16.mxu0 0
        %1136 = vmatpush1.bf16.msra.mxu0 0
        %1137 = vmatprep.subr.bf16.mxu0 0
        %1138 = vmatpush1.bf16.msra.mxu0 0
        %1139 = vmatprep.subr.bf16.mxu0 0
        %1140 = vmatpush1.bf16.msra.mxu0 0
        %1141 = vmatprep.subr.bf16.mxu0 0
        %1142 = vmatpush1.bf16.msra.mxu0 0
        %1143 = vmatprep.subr.bf16.mxu0 0
        %1144 = vmatpush1.bf16.msra.mxu0 0
        %1145 = vmatprep.mubr.bf16.mxu0 0
        %1146 = vmatmul.mubr.bf16.gmra.mrb[0].mxu0 %v1107
        %v1147 = vpop.f32.mrb[0].mxu0
        %v1148 = vadd.f32 0.0, %v1147
        %v1149 = vpop.f32.mrb[0].mxu0
        %v1150 = vpop.f32.mrb[0].mxu0
        %v1151 = vpop.f32.mrb[0].mxu0
        %1152 = vdwg.mxu0
        %1153 = vrot.lane.b32.xlu0 %v856, 64
        %v1154 = vpop.permute.xlu0 %1153
        %v1156 = vsel %vm862, %v1101, 0
        %v1159 = vsel %vm1109, %v1154, 0
        %1161 = vmatprep.subr.bf16.mxu0 0
        %1162 = vmatpush1.bf16.msra.mxu0 %v1159
        %1163 = vmatprep.subr.bf16.mxu0 0
        %1164 = vmatpush1.bf16.msra.mxu0 0
        %1165 = vmatprep.subr.bf16.mxu0 0
        %1166 = vmatpush1.bf16.msra.mxu0 0
        %1167 = vmatprep.subr.bf16.mxu0 0
        %1168 = vmatpush1.bf16.msra.mxu0 0
        %1169 = vmatprep.subr.bf16.mxu0 0
        %1170 = vmatpush1.bf16.msra.mxu0 0
        %1171 = vmatprep.subr.bf16.mxu0 0
        %1172 = vmatpush1.bf16.msra.mxu0 0
        %1173 = vmatprep.subr.bf16.mxu0 0
        %1174 = vmatpush1.bf16.msra.mxu0 0
        %1175 = vmatprep.subr.bf16.mxu0 0
        %1176 = vmatpush1.bf16.msra.mxu0 0
        %1177 = vmatprep.subr.bf16.mxu0 0
        %1178 = vmatpush1.bf16.msra.mxu0 0
        %1179 = vmatprep.subr.bf16.mxu0 0
        %1180 = vmatpush1.bf16.msra.mxu0 0
        %1181 = vmatprep.subr.bf16.mxu0 0
        %1182 = vmatpush1.bf16.msra.mxu0 0
        %1183 = vmatprep.subr.bf16.mxu0 0
        %1184 = vmatpush1.bf16.msra.mxu0 0
        %1185 = vmatprep.subr.bf16.mxu0 0
        %1186 = vmatpush1.bf16.msra.mxu0 0
        %1187 = vmatprep.subr.bf16.mxu0 0
        %1188 = vmatpush1.bf16.msra.mxu0 0
        %1189 = vmatprep.subr.bf16.mxu0 0
        %1190 = vmatpush1.bf16.msra.mxu0 0
        %1191 = vmatprep.subr.bf16.mxu0 0
        %1192 = vmatpush1.bf16.msra.mxu0 0
        %1193 = vmatprep.mubr.bf16.mxu0 0
        %1194 = vmatmul.mubr.bf16.gmra.mrb[0].mxu0 %v1156
        %v1195 = vpop.f32.mrb[0].mxu0
        %v1196 = vadd.f32 0.0, %v1195
        %v1197 = vpop.f32.mrb[0].mxu0
        %v1198 = vpop.f32.mrb[0].mxu0
        %v1199 = vpop.f32.mrb[0].mxu0
        %1200 = vdwg.mxu0
        %1201 = vrot.lane.b32.xlu0 %v857, 64
        %v1202 = vpop.permute.xlu0 %1201
        %v1204 = vsel %vm862, %v1102, 0
        %v1207 = vsel %vm1109, %v1202, 0
        %1209 = vmatprep.subr.bf16.mxu0 0
        %1210 = vmatpush1.bf16.msra.mxu0 %v1207
        %1211 = vmatprep.subr.bf16.mxu0 0
        %1212 = vmatpush1.bf16.msra.mxu0 0
        %1213 = vmatprep.subr.bf16.mxu0 0
        %1214 = vmatpush1.bf16.msra.mxu0 0
        %1215 = vmatprep.subr.bf16.mxu0 0
        %1216 = vmatpush1.bf16.msra.mxu0 0
        %1217 = vmatprep.subr.bf16.mxu0 0
        %1218 = vmatpush1.bf16.msra.mxu0 0
        %1219 = vmatprep.subr.bf16.mxu0 0
        %1220 = vmatpush1.bf16.msra.mxu0 0
        %1221 = vmatprep.subr.bf16.mxu0 0
        %1222 = vmatpush1.bf16.msra.mxu0 0
        %1223 = vmatprep.subr.bf16.mxu0 0
        %1224 = vmatpush1.bf16.msra.mxu0 0
        %1225 = vmatprep.subr.bf16.mxu0 0
        %1226 = vmatpush1.bf16.msra.mxu0 0
        %1227 = vmatprep.subr.bf16.mxu0 0
        %1228 = vmatpush1.bf16.msra.mxu0 0
        %1229 = vmatprep.subr.bf16.mxu0 0
        %1230 = vmatpush1.bf16.msra.mxu0 0
        %1231 = vmatprep.subr.bf16.mxu0 0
        %1232 = vmatpush1.bf16.msra.mxu0 0
        %1233 = vmatprep.subr.bf16.mxu0 0
        %1234 = vmatpush1.bf16.msra.mxu0 0
        %1235 = vmatprep.subr.bf16.mxu0 0
        %1236 = vmatpush1.bf16.msra.mxu0 0
        %1237 = vmatprep.subr.bf16.mxu0 0
        %1238 = vmatpush1.bf16.msra.mxu0 0
        %1239 = vmatprep.subr.bf16.mxu0 0
        %1240 = vmatpush1.bf16.msra.mxu0 0
        %1241 = vmatprep.mubr.bf16.mxu0 0
        %1242 = vmatmul.mubr.bf16.gmra.mrb[0].mxu0 %v1204
        %v1243 = vpop.f32.mrb[0].mxu0
        %v1244 = vadd.f32 0.0, %v1243
        %v1245 = vpop.f32.mrb[0].mxu0
        %v1246 = vpop.f32.mrb[0].mxu0
        %v1247 = vpop.f32.mrb[0].mxu0
        %1248 = vdwg.mxu0
        %1249 = vrot.lane.b32.xlu0 %v858, 64
        %v1250 = vpop.permute.xlu0 %1249
        %v1252 = vsel %vm862, %v1103, 0
        %v1255 = vsel %vm1109, %v1250, 0
        %1257 = vmatprep.subr.bf16.mxu0 0
        %1258 = vmatpush1.bf16.msra.mxu0 %v1255
        %1259 = vmatprep.subr.bf16.mxu0 0
        %1260 = vmatpush1.bf16.msra.mxu0 0
        %1261 = vmatprep.subr.bf16.mxu0 0
        %1262 = vmatpush1.bf16.msra.mxu0 0
        %1263 = vmatprep.subr.bf16.mxu0 0
        %1264 = vmatpush1.bf16.msra.mxu0 0
        %1265 = vmatprep.subr.bf16.mxu0 0
        %1266 = vmatpush1.bf16.msra.mxu0 0
        %1267 = vmatprep.subr.bf16.mxu0 0
        %1268 = vmatpush1.bf16.msra.mxu0 0
        %1269 = vmatprep.subr.bf16.mxu0 0
        %1270 = vmatpush1.bf16.msra.mxu0 0
        %1271 = vmatprep.subr.bf16.mxu0 0
        %1272 = vmatpush1.bf16.msra.mxu0 0
        %1273 = vmatprep.subr.bf16.mxu0 0
        %1274 = vmatpush1.bf16.msra.mxu0 0
        %1275 = vmatprep.subr.bf16.mxu0 0
        %1276 = vmatpush1.bf16.msra.mxu0 0
        %1277 = vmatprep.subr.bf16.mxu0 0
        %1278 = vmatpush1.bf16.msra.mxu0 0
        %1279 = vmatprep.subr.bf16.mxu0 0
        %1280 = vmatpush1.bf16.msra.mxu0 0
        %1281 = vmatprep.subr.bf16.mxu0 0
        %1282 = vmatpush1.bf16.msra.mxu0 0
        %1283 = vmatprep.subr.bf16.mxu0 0
        %1284 = vmatpush1.bf16.msra.mxu0 0
        %1285 = vmatprep.subr.bf16.mxu0 0
        %1286 = vmatpush1.bf16.msra.mxu0 0
        %1287 = vmatprep.subr.bf16.mxu0 0
        %1288 = vmatpush1.bf16.msra.mxu0 0
        %1289 = vmatprep.mubr.bf16.mxu0 0
        %1290 = vmatmul.mubr.bf16.gmra.mrb[0].mxu0 %v1252
        %v1291 = vpop.f32.mrb[0].mxu0
        %v1292 = vadd.f32 0.0, %v1291
        %v1293 = vpop.f32.mrb[0].mxu0
        %v1294 = vpop.f32.mrb[0].mxu0
        %v1295 = vpop.f32.mrb[0].mxu0
        %1296 = vdwg.mxu0
        %1298 = vrot.lane.b32.xlu0 %v1196, 8
        %v1299 = vpop.permute.xlu0 %1298
        %1302 = vrot.lane.b32.xlu0 %v1244, 16
        %v1303 = vpop.permute.xlu0 %1302
        %1306 = vrot.lane.b32.xlu0 %v1292, 24
        %v1307 = vpop.permute.xlu0 %1306
        %v1309 = vsel %vm862, %v1148, %v1299
        %vm1310 = vcmask 130048
        %v1311 = vsel %vm1310, %v1309, %v1303
        %vm1312 = vcmask 195584
        %v1313 = vsel %vm1312, %v1311, %v1307
        %v1314 = vpack.c.bf16 %v1313, %v1313
        %v1316 = vlaneseq
        %v1317 = vshrl.u32 %v1316, 7
        %v1318 = vsub.s32 0, %v1317
        %v1319 = vrot.slane %v739, %v1318
        %v1325 = vunpack.c.l.b16 %v735
        %v1326 = vunpack.c.l.b16 %v736
        %v1327 = vunpack.c.l.b16 %v737
        %v1328 = vunpack.c.l.b16 %v738
        %v1329 = vpack.c.b16 %v1326, %v1325
        %v1330 = vpack.c.b16 %v1328, %v1327
        %v1334 = vsel %vm754, %v1314, 0
        %1336 = vmatprep.subr.bf16.mxu0 0
        %1337 = vmatpush1.bf16.msra.mxu0 %v1329
        %1338 = vmatprep.subr.bf16.mxu0 0
        %1339 = vmatpush1.bf16.msra.mxu0 %v1330
        %1340 = vmatprep.subr.bf16.mxu0 0
        %1341 = vmatpush1.bf16.msra.mxu0 0
        %1342 = vmatprep.subr.bf16.mxu0 0
        %1343 = vmatpush1.bf16.msra.mxu0 0
        %1344 = vmatprep.subr.bf16.mxu0 0
        %1345 = vmatpush1.bf16.msra.mxu0 0
        %1346 = vmatprep.subr.bf16.mxu0 0
        %1347 = vmatpush1.bf16.msra.mxu0 0
        %1348 = vmatprep.subr.bf16.mxu0 0
        %1349 = vmatpush1.bf16.msra.mxu0 0
        %1350 = vmatprep.subr.bf16.mxu0 0
        %1351 = vmatpush1.bf16.msra.mxu0 0
        %1352 = vmatprep.subr.bf16.mxu0 0
        %1353 = vmatpush1.bf16.msra.mxu0 0
        %1354 = vmatprep.subr.bf16.mxu0 0
        %1355 = vmatpush1.bf16.msra.mxu0 0
        %1356 = vmatprep.subr.bf16.mxu0 0
        %1357 = vmatpush1.bf16.msra.mxu0 0
        %1358 = vmatprep.subr.bf16.mxu0 0
        %1359 = vmatpush1.bf16.msra.mxu0 0
        %1360 = vmatprep.subr.bf16.mxu0 0
        %1361 = vmatpush1.bf16.msra.mxu0 0
        %1362 = vmatprep.subr.bf16.mxu0 0
        %1363 = vmatpush1.bf16.msra.mxu0 0
        %1364 = vmatprep.subr.bf16.mxu0 0
        %1365 = vmatpush1.bf16.msra.mxu0 0
        %1366 = vmatprep.subr.bf16.mxu0 0
        %1367 = vmatpush1.bf16.msra.mxu0 0
        %1368 = vmatprep.mubr.bf16.mxu0 0
        %1369 = vmatmul.mubr.bf16.gmra.mrb[0].mxu0 %v1334
        %v1370 = vpop.f32.mrb[0].mxu0
        %v1371 = vadd.f32 %v1319, %v1370
        %v1372 = vpop.f32.mrb[0].mxu0
        %v1373 = vpop.f32.mrb[0].mxu0
        %v1374 = vpop.f32.mrb[0].mxu0
        %1375 = vdwg.mxu0
        %v1376 = vadd.f32 %v725, %v1371
        %v1377 = vsel %vm754, %v1376, 0.0
        %1378 = vadd.xlane.f32.xlu0 %v1377
        %v1379 = vpop.xlane.xlu0 %1378
        %v1380 = vmul.f32 %v1379, %v758
        %v1381 = vsub.f32 %v1376, %v1380
        %v1382 = vmul.f32 %v1381, %v1381
        %v1383 = vsel %vm754, %v1382, 0.0
        %1384 = vadd.xlane.f32.xlu0 %v1383
        %v1385 = vpop.xlane.xlu0 %1384
        %v1386 = vmul.f32 %v1385, %v758
        %v1387 = vadd.f32 %v1386, 1e-05
        %v1388 = vrsqrt.pop %v1387
        %v1389 = vmul.f32 %v1381, %v1388
        %v1391 = vlaneseq
        %v1392 = vshrl.u32 %v1391, 7
        %v1393 = vsub.s32 0, %v1392
        %v1394 = vrot.slane %v728, %v1393
        %v1396 = vmul.f32 %v1389, %v1394
        %v1398 = vlaneseq
        %v1399 = vshrl.u32 %v1398, 7
        %v1400 = vsub.s32 0, %v1399
        %v1401 = vrot.slane %v729, %v1400
        %v1403 = vadd.f32 %v1396, %v1401
        %v1404 = vpack.c.bf16 %v1403, %v1403
        %v1406 = vlaneseq
        %v1407 = vshrl.u32 %v1406, 7
        %v1408 = vsub.s32 0, %v1407
        %v1409 = vrot.slane %v744, %v1408
        %v1415 = vunpack.c.l.b16 %v740
        %v1416 = vunpack.c.l.b16 %v741
        %v1417 = vunpack.c.l.b16 %v742
        %v1418 = vunpack.c.l.b16 %v743
        %v1419 = vpack.c.b16 %v1416, %v1415
        %v1420 = vpack.c.b16 %v1418, %v1417
        %v1424 = vsel %vm754, %v1404, 0
        %1426 = vmatprep.subr.bf16.mxu0 0
        %1427 = vmatpush1.bf16.msra.mxu0 %v1419
        %1428 = vmatprep.subr.bf16.mxu0 0
        %1429 = vmatpush1.bf16.msra.mxu0 %v1420
        %1430 = vmatprep.subr.bf16.mxu0 0
        %1431 = vmatpush1.bf16.msra.mxu0 0
        %1432 = vmatprep.subr.bf16.mxu0 0
        %1433 = vmatpush1.bf16.msra.mxu0 0
        %1434 = vmatprep.subr.bf16.mxu0 0
        %1435 = vmatpush1.bf16.msra.mxu0 0
        %1436 = vmatprep.subr.bf16.mxu0 0
        %1437 = vmatpush1.bf16.msra.mxu0 0
        %1438 = vmatprep.subr.bf16.mxu0 0
        %1439 = vmatpush1.bf16.msra.mxu0 0
        %1440 = vmatprep.subr.bf16.mxu0 0
        %1441 = vmatpush1.bf16.msra.mxu0 0
        %1442 = vmatprep.subr.bf16.mxu0 0
        %1443 = vmatpush1.bf16.msra.mxu0 0
        %1444 = vmatprep.subr.bf16.mxu0 0
        %1445 = vmatpush1.bf16.msra.mxu0 0
        %1446 = vmatprep.subr.bf16.mxu0 0
        %1447 = vmatpush1.bf16.msra.mxu0 0
        %1448 = vmatprep.subr.bf16.mxu0 0
        %1449 = vmatpush1.bf16.msra.mxu0 0
        %1450 = vmatprep.subr.bf16.mxu0 0
        %1451 = vmatpush1.bf16.msra.mxu0 0
        %1452 = vmatprep.subr.bf16.mxu0 0
        %1453 = vmatpush1.bf16.msra.mxu0 0
        %1454 = vmatprep.subr.bf16.mxu0 0
        %1455 = vmatpush1.bf16.msra.mxu0 0
        %1456 = vmatprep.subr.bf16.mxu0 0
        %1457 = vmatpush1.bf16.msra.mxu0 0
        %1458 = vmatprep.mubr.bf16.mxu0 0
        %1459 = vmatmul.mubr.bf16.gmra.mrb[0].mxu0 %v1424
        %v1460 = vpop.f32.mrb[0].mxu0
        %v1461 = vadd.f32 %v1409, %v1460
        %v1462 = vpop.f32.mrb[0].mxu0
        %v1463 = vpop.f32.mrb[0].mxu0
        %v1464 = vpop.f32.mrb[0].mxu0
        %1465 = vdwg.mxu0
        %v1466 = vmul.f32 %v1461, 0.5
        %v1467 = vmul.f32 %v1461, %v1461
        %v1468 = vmul.f32 %v1467, %v1461
        %v1469 = vmul.f32 %v1468, 0.044715
        %v1470 = vadd.f32 %v1461, %v1469
        %v1471 = vmul.f32 %v1470, 0.7978846
        %v1472 = vtanh.pop %v1471
        %v1473 = vadd.f32 %v1472, 1.0
        %v1474 = vmul.f32 %v1466, %v1473
        %v1475 = vpack.c.bf16 %v1474, %v1474
        %v1477 = vlaneseq
        %v1478 = vshrl.u32 %v1477, 7
        %v1479 = vsub.s32 0, %v1478
        %v1480 = vrot.slane %v753, %v1479
        %v1490 = vunpack.c.l.b16 %v745
        %v1491 = vunpack.c.l.b16 %v746
        %v1492 = vunpack.c.l.b16 %v747
        %v1493 = vunpack.c.l.b16 %v748
        %v1494 = vunpack.c.l.b16 %v749
        %v1495 = vunpack.c.l.b16 %v750
        %v1496 = vunpack.c.l.b16 %v751
        %v1497 = vunpack.c.l.b16 %v752
        %v1498 = vpack.c.b16 %v1491, %v1490
        %v1499 = vpack.c.b16 %v1493, %v1492
        %v1500 = vpack.c.b16 %v1495, %v1494
        %v1501 = vpack.c.b16 %v1497, %v1496
        %vm1506 = vcmask 523264
        %v1508 = vsel %vm1506, %v1475, 0
        %1510 = vmatprep.subr.bf16.mxu0 0
        %1511 = vmatpush1.bf16.msra.mxu0 %v1498
        %1512 = vmatprep.subr.bf16.mxu0 0
        %1513 = vmatpush1.bf16.msra.mxu0 %v1499
        %1514 = vmatprep.subr.bf16.mxu0 0
        %1515 = vmatpush1.bf16.msra.mxu0 %v1500
        %1516 = vmatprep.subr.bf16.mxu0 0
        %1517 = vmatpush1.bf16.msra.mxu0 %v1501
        %1518 = vmatprep.subr.bf16.mxu0 0
        %1519 = vmatpush1.bf16.msra.mxu0 0
        %1520 = vmatprep.subr.bf16.mxu0 0
        %1521 = vmatpush1.bf16.msra.mxu0 0
        %1522 = vmatprep.subr.bf16.mxu0 0
        %1523 = vmatpush1.bf16.msra.mxu0 0
        %1524 = vmatprep.subr.bf16.mxu0 0
        %1525 = vmatpush1.bf16.msra.mxu0 0
        %1526 = vmatprep.subr.bf16.mxu0 0
        %1527 = vmatpush1.bf16.msra.mxu0 0
        %1528 = vmatprep.subr.bf16.mxu0 0
        %1529 = vmatpush1.bf16.msra.mxu0 0
        %1530 = vmatprep.subr.bf16.mxu0 0
        %1531 = vmatpush1.bf16.msra.mxu0 0
        %1532 = vmatprep.subr.bf16.mxu0 0
        %1533 = vmatpush1.bf16.msra.mxu0 0
        %1534 = vmatprep.subr.bf16.mxu0 0
        %1535 = vmatpush1.bf16.msra.mxu0 0
        %1536 = vmatprep.subr.bf16.mxu0 0
        %1537 = vmatpush1.bf16.msra.mxu0 0
        %1538 = vmatprep.subr.bf16.mxu0 0
        %1539 = vmatpush1.bf16.msra.mxu0 0
        %1540 = vmatprep.subr.bf16.mxu0 0
        %1541 = vmatpush1.bf16.msra.mxu0 0
        %1542 = vmatprep.mubr.bf16.mxu0 0
        %1543 = vmatmul.mubr.bf16.gmra.mrb[0].mxu0 %v1508
        %v1544 = vpop.f32.mrb[0].mxu0
        %v1545 = vadd.f32 %v1480, %v1544
        %v1546 = vpop.f32.mrb[0].mxu0
        %v1547 = vpop.f32.mrb[0].mxu0
        %v1548 = vpop.f32.mrb[0].mxu0
        %1549 = vdwg.mxu0
        %v1550 = vadd.f32 %v1376, %v1545
        %1551 = vst.msk [vmem:[%s681] sm:$0xff] %vm754, %v1550
        %s1552 = sand.u32 %s394, 1
        %s1553 = scalar_lea.sflag [#allocation4], %s1552
        %s1554 = sand.u32 %s394, 1
        %s1555 = smul.addr %s1554, 8
        %s1556 = scalar_lea.vmem [#allocation10], %s1555
        // Predicated region
        $region93: #{tpu_custom_call.1} parent=71 // pred_check
          %p1557 = pneg %p404
        $region94: #{tpu_custom_call.1} parent=71 // pred_check_branch
          %1559 = sbr.rel (%p1557) target = $region96
        $region95: #{tpu_custom_call.1} parent=71 // pred_region
          %s1561 = ssub.s32 128, 128
          %1562 = vsyncadd %s1553, %s1561
          %s1563 = smul.addr %s40, 128
          %s1564 = scalar_lea.hbm %s13, %s1563
          %s1566 = sshll.u32 %s1556, 4
          %s1567 = int_to_ptr.vmem [resolvable:$true] %s1566
          %1569 = dma.vmem_to_hbm [thread:$0]  %s1567, 128, %s1564, %s1553
        $region96: #{tpu_custom_call.1} parent=71 // pred_fallthru
          _
      $region72: #{tpu_custom_call.1} parent=5 // pred_fallthru
        _
      %p1570 = scmp.le.s32.totalorder 2, %s31
      // Predicated region
      $region97: #{tpu_custom_call.1} parent=5 // pred_check
        %p1571 = pneg %p1570
      $region98: #{tpu_custom_call.1} parent=5 // pred_check_branch
        %1573 = sbr.rel (%p1571) target = $region100
      $region99: #{tpu_custom_call.1} parent=5 // pred_region
        %s1574 = ssub.s32 %s31, 2
        // Predicated region
        $region101: #{tpu_custom_call.1} parent=99 // pred_check
          %p1575 = pneg %p410
        $region102: #{tpu_custom_call.1} parent=99 // pred_check_branch
          %1577 = sbr.rel (%p1575) target = $region104
        $region103: #{tpu_custom_call.1} parent=99 // pred_region
          %s1578 = sand.u32 %s395, 1
          %s1579 = scalar_lea.sflag [#allocation4], %s1578
          %s1580 = sand.u32 %s395, 1
          %s1581 = smul.addr %s1580, 8
          %s1582 = scalar_lea.vmem [#allocation10], %s1581
          %1583 = dma.done %s1579, 128
        $region104: #{tpu_custom_call.1} parent=99 // pred_fallthru
          _
      $region100: #{tpu_custom_call.1} parent=5 // pred_fallthru
        _
    $region6: #{tpu_custom_call.1} parent=1 // loop_footer
      %s35 = sadd.s32 1, %s31
    $region7: #{tpu_custom_call.1} parent=1 // loop_footer_branch
      %30 = sbr.rel target = $region3
    $region8: #{tpu_custom_call.1} parent=1 // loop_exit
      _
    %1584 = vsyncpa [#allocation3], 1
    %s1585 = scalar_lea.sflag [#allocation3], 1
    %1586 = vsyncpa %s1585, 1
    %1587 = vsyncpa [#allocation6], 1
    %s1588 = scalar_lea.sflag [#allocation6], 1
    %1589 = vsyncpa %s1588, 1
    %1590 = vsyncpa [#allocation9], 1
    %s1591 = scalar_lea.sflag [#allocation9], 1
    %1592 = vsyncpa %s1591, 1
    %1593 = vsyncpa [#allocation4], 1
    %s1594 = scalar_lea.sflag [#allocation4], 1
    %1595 = vsyncpa %s1594, 1

</llo_original>
